<compile_context>
chip_gen: v5e
topology: v5e:2x2
jax: 0.10.0
libtpu: 0.0.40
codegen_flags: <defaults>
</compile_context>

<pallas_src>
import numpy as np
import jax
import jax.numpy as jnp
from jax.experimental import pallas as pl
from jax.experimental.pallas import tpu as pltpu


# -----------------------------------------------------------------------------
# Pallas kernel: whole DHNet.forward (inverse_step + denoise_step + u update)
# -----------------------------------------------------------------------------
def _dhnet_kernel(vuy_ref, fs_ref, is_ref, w_ref, d_ref,
                  rs1_ref, rs2_ref, cs_ref, p_ref, out_ref):
    _, H, NW = vuy_ref.shape                       # (3, H, N*W)

    v = vuy_ref[0]                                 # (H, NW)
    u = vuy_ref[1]
    y = vuy_ref[2]

    f_stk = fs_ref[...]                            # (2H, H)   [Fr; Fi]
    i_stk = is_ref[...]                            # (2H, 2H)  [[Ir,-Ii],[Ii,Ir]]
    fwr = w_ref[0]; fwi = w_ref[1]                 # (NW, NW) kron(I_N, F_W)
    iwr = w_ref[2]; iwi = w_ref[3]                 # (NW, NW) kron(I_N, F_W^-1)
    atr_s = d_ref[0]; ati_s = d_ref[1]             # (2H, NW) AT (signed stacks)
    dr_s = d_ref[2]; di_s = d_ref[3]               # (2H, NW) d = rho + AT*A
    dinv_s = d_ref[4]                              # (2H, NW) 1 / |d|^2
    rs1_m = rs1_ref[0]; rs1_p = rs1_ref[1]         # (H, H)   row shifts
    rs2_m = rs2_ref[0]; rs2_p = rs2_ref[1]         # (2H, 2H) row shifts, doubled slab
    cs_m = cs_ref[0]; cs_p = cs_ref[1]             # (NW, NW) column shifts (block-diag)

    rho = p_ref[45]
    soft_thr = p_ref[44]

    def dotf(a, b):
        return jnp.dot(a, b, preferred_element_type=jnp.float32)

    def swap_halves(x):                            # [xr; xi] -> [xi; xr] (tile-aligned)
        return jnp.concatenate([x[H:], x[:H]], axis=0)

    def right_dft(t_stk, wr, wi):
        # (tr + i*ti) @ (wr + i*wi) with t_stk = [tr; ti]:
        # two (2H,NW)@(NW,NW) matmuls + tile-aligned sublane-slice adds.
        r = dotf(t_stk, wr)
        s = dotf(t_stk, wi)
        return jnp.concatenate([r[:H] - s[H:], s[:H] + r[H:]], axis=0)

    def fft2_real(x):                              # real (H,NW) -> stacked (2H,NW)
        return right_dft(dotf(f_stk, x), fwr, fwi)

    def ifft2_stacked(z_stk):                      # stacked (2H,NW) -> stacked (2H,NW)
        return right_dft(dotf(i_stk, z_stk), iwr, iwi)

    def cmul_stacked(x_stk, cr_s, ci_signed):
        # Elementwise complex multiply in stacked layout; the +/- sign pattern
        # of the imaginary part is precomputed on the host.
        return x_stk * cr_s + swap_halves(x_stk) * ci_signed

    def cabs_stacked(z_stk):
        zr = z_stk[:H]
        zi = z_stk[H:]
        return jnp.sqrt(zr * zr + zi * zi)

    def leaky(x):                                  # nn.LeakyReLU (slope 0.01)
        return jnp.where(x > 0, x, 0.01 * x)

    def norm01(x):
        # norm_tensor: (x - min) / (max - min).  No epsilon, mirroring the
        # reference exactly.  Reciprocal runs on the EUP (approx vrcp) on a
        # broadcast vector, off the VPU-divide critical path.
        xmin = jnp.min(x)
        xmax = jnp.max(x)
        inv = pl.reciprocal((xmax - xmin) * jnp.ones_like(x), approx=True)
        return (x - xmin) * inv, xmin, xmax

    # ------------------------ inverse step (whole batch) ---------------------
    yf = fft2_real(y)                              # fft2(y)
    zf = cmul_stacked(yf, atr_s, ati_s)            # fft2(y) * AT
    temp1 = cabs_stacked(ifft2_stacked(zf))        # |ifft2(.)|
    temp, _, _ = norm01(temp1)
    temp = temp + rho * (v - u)                    # + rho * o_tilde
    nf = fft2_real(temp)
    qf = cmul_stacked(nf, dr_s, di_s) * dinv_s     # n / d  (d precomputed on host)
    o_img = cabs_stacked(ifft2_stacked(qf))        # o^{k+1}

    # ------------------------ denoise step ------------------------------------
    v_tilde = o_img + u
    xin, vmin, vmax = norm01(v_tilde)

    def conv3x3(x, wbase, rm, rp, cm, cp):
        # 3x3 "same" conv of every image with 4 batched matmuls: row taps via
        # row-shift matrices, column taps via block-diagonal column shifts.
        w = [p_ref[wbase + k] for k in range(9)]   # hoisted scalar taps
        r_m = dotf(rm, x)                          # x[i-1, :]
        r_p = dotf(rp, x)                          # x[i+1, :]
        left = w[0] * r_m + w[3] * x + w[6] * r_p
        mid = w[1] * r_m + w[4] * x + w[7] * r_p
        right = w[2] * r_m + w[5] * x + w[8] * r_p
        return dotf(left, cm) + mid + dotf(right, cp)

    def cbl(x, wbase, bn_idx, act, rm, rp, cm, cp):
        h = conv3x3(x, wbase, rm, rp, cm, cp)
        # BatchNorm2d folded to affine (eval-mode default stats).
        # TODO(synk): training-mode BatchNorm (batch statistics) not modelled.
        h = h * p_ref[36 + 2 * bn_idx] + p_ref[36 + 2 * bn_idx + 1]
        return leaky(h) if act else h

    def res_block(x, wa, wb, ba, bb, rm, rp, cm, cp):
        h = cbl(x, wa, ba, True, rm, rp, cm, cp)
        h = cbl(h, wb, bb, False, rm, rp, cm, cp)
        return leaky(x + h)

    x1 = res_block(xin, 0, 9, 0, 1, rs1_m, rs1_p, cs_m, cs_p)      # resblock1

    # SoftThreshold: sign(x) * relu(|x| - thr)
    sgn = jnp.where(x1 > 0, 1.0, jnp.where(x1 < 0, -1.0, 0.0))
    xthr = sgn * jnp.maximum(jnp.abs(x1) - soft_thr, 0.0)

    # resblock2 shared between x_thr and x1 -> one pass on a sublane-doubled
    # slab [x_thr; x1] (2H, NW); assembly and split are tile-aligned value ops
    # (no scratch, no store/re-load round trip).
    cat = jnp.concatenate([xthr, x1], axis=0)
    rcat = res_block(cat, 18, 27, 2, 3, rs2_m, rs2_p, cs_m, cs_p)
    x_out = rcat[:H]                               # resblock2(x_thr)
    x_fb = rcat[H:]                                # resblock2(x1)

    sym = x_fb - xin                               # stage_symloss
    xo_n, _, _ = norm01(x_out)
    v_next = vmin + (vmax - vmin) * xo_n
    u_next = u + (o_img - v_next)

    # Single lane-dense output slab [o | v_next | u_next | sym]; at NW=128 the
    # four region stores are 128-aligned unmasked vst and the output is one DMA.
    out_ref[:, 0:NW] = o_img
    out_ref[:, NW:2 * NW] = v_next
    out_ref[:, 2 * NW:3 * NW] = u_next
    out_ref[:, 3 * NW:4 * NW] = sym


# -----------------------------------------------------------------------------
# Host-side constants / parameters
# -----------------------------------------------------------------------------
def generate_otf(wavelength, nx, ny, dx, dy, distance):
    # Angular-spectrum transfer function (same role as generate_otf_torch).
    fx = (np.arange(nx) - nx / 2.0) / (nx * dx)
    fy = (np.arange(ny) - ny / 2.0) / (ny * dy)
    qx, qy = np.meshgrid(fx, fy, indexing="ij")
    k = 1.0 / wavelength
    arg = np.sqrt(np.maximum(k ** 2 - qx ** 2 - qy ** 2, 0.0))
    otf = np.exp(-2j * np.pi * distance * arg)
    return np.fft.fftshift(otf).astype(np.complex64)


def build_constants(N, H, W, wavelength=632.8e-9, dx=3.45e-6, dy=3.45e-6,
                    distance=0.02, rho=0.001, soft_thr=0.01):
    A = generate_otf(wavelength, H, W, dx, dy, distance)
    AT = generate_otf(wavelength, H, W, dx, dy, -distance)

    def dft(n):
        idx = np.arange(n)
        ang = -2.0 * np.pi * np.outer(idx, idx) / n
        return np.cos(ang).astype(np.float32), np.sin(ang).astype(np.float32)

    fhr, fhi = dft(H)
    fwr, fwi = dft(W)
    ihr = (fhr / H).astype(np.float32)
    ihi = (-fhi / H).astype(np.float32)
    iwr = (fwr / W).astype(np.float32)
    iwi = (-fwi / W).astype(np.float32)

    # Fused real/imag left-DFT stacks: one matmul per left transform.
    f_stack = np.concatenate([fhr, fhi], axis=0).astype(np.float32)       # (2H, H)
    i_stack = np.block([[ihr, -ihi], [ihi, ihr]]).astype(np.float32)      # (2H, 2H)

    # Block-diagonal right-DFT matrices: whole batch in one matmul.
    # TODO(synk): at realistic sizes use per-image (W,W) matrices + a grid
    # over N instead of kron(I_N, .) to fit v7x's 64 MiB VMEM.
    eye_n = np.eye(N, dtype=np.float32)
    wstack = np.stack([np.kron(eye_n, m) for m in (fwr, fwi, iwr, iwi)]
                      ).astype(np.float32)                                # (4, NW, NW)

    def tile_n(m):
        return np.tile(m.astype(np.float32), (1, N))

    atr = tile_n(AT.real)
    ati = tile_n(AT.imag)
    d = rho + AT * A                               # d = rho + AT*A
    d = np.where(d == 0, np.complex64(1e-8), d).astype(np.complex64)
    dr = tile_n(d.real)
    di = tile_n(d.imag)
    dinv = tile_n(1.0 / (d.real ** 2 + d.imag ** 2))

    def vstk(a, b):
        return np.concatenate([a, b], axis=0)

    dstack = np.stack([
        vstk(atr, atr),            # AT real, both halves
        vstk(-ati, ati),           # AT imag with stacked-multiply sign pattern
        vstk(dr, dr),              # d real
        vstk(di, -di),             # conj(d) imag sign pattern (n/d = n*conj(d)/|d|^2)
        vstk(dinv, dinv),          # 1 / |d|^2
    ]).astype(np.float32)                                                  # (5, 2H, NW)

    # Shift matrices for the 3x3 conv taps (batched over the slab).
    def row_shift(n, a):
        m = np.zeros((n, n), np.float32)
        for i in range(n):
            if 0 <= i + a < n:
                m[i, i + a] = 1.0
        return m

    def col_shift(n, b):
        m = np.zeros((n, n), np.float32)
        for j in range(n):
            if 0 <= j + b < n:
                m[j + b, j] = 1.0
        return m

    rs1 = np.stack([row_shift(H, -1), row_shift(H, 1)]).astype(np.float32)   # (2, H, H)
    eye2 = np.eye(2, dtype=np.float32)
    rs2 = np.stack([np.kron(eye2, row_shift(H, -1)),
                    np.kron(eye2, row_shift(H, 1))]).astype(np.float32)      # (2, 2H, 2H)
    cs = np.stack([np.kron(eye_n, col_shift(W, -1)),
                   np.kron(eye_n, col_shift(W, 1))]).astype(np.float32)      # (2, NW, NW)

    # Deterministic denoiser parameters (4 conv layers, 1->1 channels, 3x3).
    key = jax.random.PRNGKey(0)
    keys = jax.random.split(key, 4)
    convs = [np.asarray(jax.random.normal(k, (3, 3), jnp.float32)) * 0.1
             for k in keys]
    params = np.zeros(64, np.float32)
    for i, wmat in enumerate(convs):
        params[9 * i: 9 * i + 9] = wmat.ravel()
    eps = 1e-5
    for i in range(4):
        params[36 + 2 * i] = 1.0 / np.sqrt(1.0 + eps)   # BN folded (eval stats)
        params[36 + 2 * i + 1] = 0.0
    params[44] = soft_thr       # SoftThreshold.soft_thr
    params[45] = rho            # rho

    return dict(
        f_stack=jnp.asarray(f_stack), i_stack=jnp.asarray(i_stack),
        wstack=jnp.asarray(wstack), dstack=jnp.asarray(dstack),
        rs1=jnp.asarray(rs1), rs2=jnp.asarray(rs2), cs=jnp.asarray(cs),
        params=jnp.asarray(params),
    )


# -----------------------------------------------------------------------------
# Wrapper
# -----------------------------------------------------------------------------
def dhnet_forward(o, v, u, y, consts):
    # The PyTorch forward ignores the `o` argument (inverse_step recomputes it).
    del o
    B, C, H, W = v.shape
    N = B * C
    NW = N * W
    f32 = jnp.float32

    def to_slab(x):
        # (B,C,H,W) -> (H, N*W): image n occupies lane-columns [n*W, (n+1)*W).
        return x.reshape(N, H, W).transpose(1, 0, 2).reshape(H, NW).astype(f32)

    def from_slab(x2):
        return x2.reshape(H, N, W).transpose(1, 0, 2).reshape(B, C, H, W)

    # Single consolidated input DMA for v/u/y, stacked on a leading axis so the
    # kernel indexes whole contiguous (H, NW) planes (no lane-offset loads).
    vuy = jnp.stack([to_slab(v), to_slab(u), to_slab(y)], axis=0)

    vmem = pl.BlockSpec(memory_space=pltpu.MemorySpace.VMEM)
    smem = pl.BlockSpec(memory_space=pltpu.MemorySpace.SMEM)

    # Single lane-dense output slab: [o | v_next | u_next | sym], (H, 4*N*W).
    out_shape = jax.ShapeDtypeStruct((H, 4 * NW), f32)

    in_arrays = (vuy, consts["f_stack"], consts["i_stack"], consts["wstack"],
                 consts["dstack"], consts["rs1"], consts["rs2"], consts["cs"],
                 consts["params"])

    in_bytes = sum(int(np.prod(a.shape)) * a.dtype.itemsize for a in in_arrays)
    out_bytes = H * 4 * NW * 4
    bytes_accessed = in_bytes + out_bytes

    # Advisory: 12 fused DFT matmuls + 16 batched conv matmuls.
    H2 = 2 * H
    fft_flops = (2 * (2 * H2 * H * NW)             # forward left DFT x2
                 + 2 * (2 * H2 * H2 * NW)          # inverse left DFT x2
                 + 4 * 2 * (2 * H2 * NW * NW))     # right DFT (2 matmuls) x4
    conv_flops = (2 * (2 * (2 * H * H * NW) + 2 * (2 * H * NW * NW))        # resblock1
                  + 2 * (2 * (2 * H2 * H2 * NW) + 2 * (2 * H2 * NW * NW)))  # resblock2
    cost = pl.CostEstimate(flops=int(fft_flops + conv_flops),
                           transcendentals=int(5 * H * NW),
                           bytes_accessed=int(bytes_accessed))

    # Resident footprint with pipeline-buffer headroom, capped below v7x's
    # 64 MiB physical per-core VMEM.
    vmem_limit = int(min(48 * 1024 * 1024,
                         max(4 * 1024 * 1024, 8 * bytes_accessed)))

    out_slab = pl.pallas_call(
        _dhnet_kernel,
        out_shape=out_shape,
        in_specs=[vmem] * 8 + [smem],
        out_specs=vmem,
        compiler_params=pltpu.CompilerParams(vmem_limit_bytes=vmem_limit),
        cost_estimate=cost,
    )(*in_arrays)

    o2 = out_slab[:, 0:NW]
    v2 = out_slab[:, NW:2 * NW]
    u2 = out_slab[:, 2 * NW:3 * NW]
    sym = out_slab[:, 3 * NW:4 * NW]

    numel = float(N * H * W)
    stage_loss = jnp.sqrt(jnp.sum(sym * sym)) / numel
    return from_slab(o2), from_slab(v2), from_slab(u2), stage_loss


if __name__ == "__main__":
    # Batch of 8 single-channel 16x16 images so the slab lane width N*W = 128:
    # full vreg lane occupancy, unmasked stores (review item 4).
    B, C, H, W = 8, 1, 16, 16
    N = B * C
    consts = build_constants(N, H, W)

    key = jax.random.PRNGKey(0)
    ko, kv, ku, ky = jax.random.split(key, 4)
    o = jax.random.uniform(ko, (B, C, H, W), jnp.float32)
    v = jax.random.uniform(kv, (B, C, H, W), jnp.float32)
    u = jax.random.normal(ku, (B, C, H, W), jnp.float32) * 0.05
    y = jax.random.uniform(ky, (B, C, H, W), jnp.float32)

    o_out, v_out, u_out, loss = dhnet_forward(o, v, u, y, consts)
    jax.block_until_ready((o_out, v_out, u_out, loss))

    assert o_out.shape == (B, C, H, W)
    assert v_out.shape == (B, C, H, W)
    assert u_out.shape == (B, C, H, W)
    assert bool(jnp.all(jnp.isfinite(o_out)))
    assert bool(jnp.all(jnp.isfinite(v_out)))
    assert bool(jnp.all(jnp.isfinite(u_out)))
    assert bool(jnp.isfinite(loss))
    print("KERNEL_OK")
</pallas_src>

<mosaic_0001>
module attributes {stable_mosaic.version = 11 : i64} {
  func.func @_dhnet_kernel(%arg0: memref<3x16x128xf32, #tpu.memory_space<vmem>>, %arg1: memref<32x16xf32, #tpu.memory_space<vmem>>, %arg2: memref<32x32xf32, #tpu.memory_space<vmem>>, %arg3: memref<4x128x128xf32, #tpu.memory_space<vmem>>, %arg4: memref<5x32x128xf32, #tpu.memory_space<vmem>>, %arg5: memref<2x16x16xf32, #tpu.memory_space<vmem>>, %arg6: memref<2x32x32xf32, #tpu.memory_space<vmem>>, %arg7: memref<2x128x128xf32, #tpu.memory_space<vmem>>, %arg8: memref<64xf32, #tpu.memory_space<smem>>, %arg9: memref<16x512xf32, #tpu.memory_space<vmem>>) attributes {dimension_semantics = [], scalar_prefetch = 0 : i64, scratch_operands = 0 : i64, tpu.core_type = #tpu.core_type<tc>} {
    %c0 = arith.constant 0 : index
    %c0_0 = arith.constant 0 : index
    %c0_1 = arith.constant 0 : index
    %0 = vector.load %arg0[%c0, %c0_0, %c0_1] : memref<3x16x128xf32, #tpu.memory_space<vmem>>, vector<1x16x128xf32>
    %1 = vector.shape_cast %0 : vector<1x16x128xf32> to vector<16x128xf32>
    %c1 = arith.constant 1 : index
    %c0_2 = arith.constant 0 : index
    %c0_3 = arith.constant 0 : index
    %2 = vector.load %arg0[%c1, %c0_2, %c0_3] : memref<3x16x128xf32, #tpu.memory_space<vmem>>, vector<1x16x128xf32>
    %3 = vector.shape_cast %2 : vector<1x16x128xf32> to vector<16x128xf32>
    %c2 = arith.constant 2 : index
    %c0_4 = arith.constant 0 : index
    %c0_5 = arith.constant 0 : index
    %4 = vector.load %arg0[%c2, %c0_4, %c0_5] : memref<3x16x128xf32, #tpu.memory_space<vmem>>, vector<1x16x128xf32>
    %5 = vector.shape_cast %4 : vector<1x16x128xf32> to vector<16x128xf32>
    %c0_6 = arith.constant 0 : index
    %c0_7 = arith.constant 0 : index
    %6 = vector.load %arg1[%c0_6, %c0_7] : memref<32x16xf32, #tpu.memory_space<vmem>>, vector<32x16xf32>
    %c0_8 = arith.constant 0 : index
    %c0_9 = arith.constant 0 : index
    %7 = vector.load %arg2[%c0_8, %c0_9] : memref<32x32xf32, #tpu.memory_space<vmem>>, vector<32x32xf32>
    %c0_10 = arith.constant 0 : index
    %c0_11 = arith.constant 0 : index
    %c0_12 = arith.constant 0 : index
    %8 = vector.load %arg3[%c0_10, %c0_11, %c0_12] : memref<4x128x128xf32, #tpu.memory_space<vmem>>, vector<1x128x128xf32>
    %9 = vector.shape_cast %8 : vector<1x128x128xf32> to vector<128x128xf32>
    %c1_13 = arith.constant 1 : index
    %c0_14 = arith.constant 0 : index
    %c0_15 = arith.constant 0 : index
    %10 = vector.load %arg3[%c1_13, %c0_14, %c0_15] : memref<4x128x128xf32, #tpu.memory_space<vmem>>, vector<1x128x128xf32>
    %11 = vector.shape_cast %10 : vector<1x128x128xf32> to vector<128x128xf32>
    %c2_16 = arith.constant 2 : index
    %c0_17 = arith.constant 0 : index
    %c0_18 = arith.constant 0 : index
    %12 = vector.load %arg3[%c2_16, %c0_17, %c0_18] : memref<4x128x128xf32, #tpu.memory_space<vmem>>, vector<1x128x128xf32>
    %13 = vector.shape_cast %12 : vector<1x128x128xf32> to vector<128x128xf32>
    %c3 = arith.constant 3 : index
    %c0_19 = arith.constant 0 : index
    %c0_20 = arith.constant 0 : index
    %14 = vector.load %arg3[%c3, %c0_19, %c0_20] : memref<4x128x128xf32, #tpu.memory_space<vmem>>, vector<1x128x128xf32>
    %15 = vector.shape_cast %14 : vector<1x128x128xf32> to vector<128x128xf32>
    %c0_21 = arith.constant 0 : index
    %c0_22 = arith.constant 0 : index
    %c0_23 = arith.constant 0 : index
    %16 = vector.load %arg4[%c0_21, %c0_22, %c0_23] : memref<5x32x128xf32, #tpu.memory_space<vmem>>, vector<1x32x128xf32>
    %17 = vector.shape_cast %16 : vector<1x32x128xf32> to vector<32x128xf32>
    %c1_24 = arith.constant 1 : index
    %c0_25 = arith.constant 0 : index
    %c0_26 = arith.constant 0 : index
    %18 = vector.load %arg4[%c1_24, %c0_25, %c0_26] : memref<5x32x128xf32, #tpu.memory_space<vmem>>, vector<1x32x128xf32>
    %19 = vector.shape_cast %18 : vector<1x32x128xf32> to vector<32x128xf32>
    %c2_27 = arith.constant 2 : index
    %c0_28 = arith.constant 0 : index
    %c0_29 = arith.constant 0 : index
    %20 = vector.load %arg4[%c2_27, %c0_28, %c0_29] : memref<5x32x128xf32, #tpu.memory_space<vmem>>, vector<1x32x128xf32>
    %21 = vector.shape_cast %20 : vector<1x32x128xf32> to vector<32x128xf32>
    %c3_30 = arith.constant 3 : index
    %c0_31 = arith.constant 0 : index
    %c0_32 = arith.constant 0 : index
    %22 = vector.load %arg4[%c3_30, %c0_31, %c0_32] : memref<5x32x128xf32, #tpu.memory_space<vmem>>, vector<1x32x128xf32>
    %23 = vector.shape_cast %22 : vector<1x32x128xf32> to vector<32x128xf32>
    %c4 = arith.constant 4 : index
    %c0_33 = arith.constant 0 : index
    %c0_34 = arith.constant 0 : index
    %24 = vector.load %arg4[%c4, %c0_33, %c0_34] : memref<5x32x128xf32, #tpu.memory_space<vmem>>, vector<1x32x128xf32>
    %25 = vector.shape_cast %24 : vector<1x32x128xf32> to vector<32x128xf32>
    %c0_35 = arith.constant 0 : index
    %c0_36 = arith.constant 0 : index
    %c0_37 = arith.constant 0 : index
    %26 = vector.load %arg5[%c0_35, %c0_36, %c0_37] : memref<2x16x16xf32, #tpu.memory_space<vmem>>, vector<1x16x16xf32>
    %27 = vector.shape_cast %26 : vector<1x16x16xf32> to vector<16x16xf32>
    %c1_38 = arith.constant 1 : index
    %c0_39 = arith.constant 0 : index
    %c0_40 = arith.constant 0 : index
    %28 = vector.load %arg5[%c1_38, %c0_39, %c0_40] : memref<2x16x16xf32, #tpu.memory_space<vmem>>, vector<1x16x16xf32>
    %29 = vector.shape_cast %28 : vector<1x16x16xf32> to vector<16x16xf32>
    %c0_41 = arith.constant 0 : index
    %c0_42 = arith.constant 0 : index
    %c0_43 = arith.constant 0 : index
    %30 = vector.load %arg6[%c0_41, %c0_42, %c0_43] : memref<2x32x32xf32, #tpu.memory_space<vmem>>, vector<1x32x32xf32>
    %31 = vector.shape_cast %30 : vector<1x32x32xf32> to vector<32x32xf32>
    %c1_44 = arith.constant 1 : index
    %c0_45 = arith.constant 0 : index
    %c0_46 = arith.constant 0 : index
    %32 = vector.load %arg6[%c1_44, %c0_45, %c0_46] : memref<2x32x32xf32, #tpu.memory_space<vmem>>, vector<1x32x32xf32>
    %33 = vector.shape_cast %32 : vector<1x32x32xf32> to vector<32x32xf32>
    %c0_47 = arith.constant 0 : index
    %c0_48 = arith.constant 0 : index
    %c0_49 = arith.constant 0 : index
    %34 = vector.load %arg7[%c0_47, %c0_48, %c0_49] : memref<2x128x128xf32, #tpu.memory_space<vmem>>, vector<1x128x128xf32>
    %35 = vector.shape_cast %34 : vector<1x128x128xf32> to vector<128x128xf32>
    %c1_50 = arith.constant 1 : index
    %c0_51 = arith.constant 0 : index
    %c0_52 = arith.constant 0 : index
    %36 = vector.load %arg7[%c1_50, %c0_51, %c0_52] : memref<2x128x128xf32, #tpu.memory_space<vmem>>, vector<1x128x128xf32>
    %37 = vector.shape_cast %36 : vector<1x128x128xf32> to vector<128x128xf32>
    %c45 = arith.constant 45 : index
    %38 = memref.load %arg8[%c45] : memref<64xf32, #tpu.memory_space<smem>>
    %c44 = arith.constant 44 : index
    %39 = memref.load %arg8[%c44] : memref<64xf32, #tpu.memory_space<smem>>
    %cst = arith.constant dense<0.000000e+00> : vector<32x128xf32>
    %40 = tpu.matmul %6, %5, %cst {dimension_numbers = #tpu.dot_dimension_numbers<[1], [0], [0], [1], [0, 0, 1, 1], [], []>} : vector<32x16xf32>, vector<16x128xf32>, vector<32x128xf32> -> vector<32x128xf32>
    %cst_53 = arith.constant dense<0.000000e+00> : vector<32x128xf32>
    %41 = tpu.matmul %40, %9, %cst_53 {dimension_numbers = #tpu.dot_dimension_numbers<[1], [0], [0], [1], [0, 0, 1, 1], [], []>} : vector<32x128xf32>, vector<128x128xf32>, vector<32x128xf32> -> vector<32x128xf32>
    %cst_54 = arith.constant dense<0.000000e+00> : vector<32x128xf32>
    %42 = tpu.matmul %40, %11, %cst_54 {dimension_numbers = #tpu.dot_dimension_numbers<[1], [0], [0], [1], [0, 0, 1, 1], [], []>} : vector<32x128xf32>, vector<128x128xf32>, vector<32x128xf32> -> vector<32x128xf32>
    %43 = vector.extract_strided_slice %41 {offsets = [0, 0], sizes = [16, 128], strides = [1, 1]} : vector<32x128xf32> to vector<16x128xf32>
    %44 = vector.extract_strided_slice %42 {offsets = [16, 0], sizes = [16, 128], strides = [1, 1]} : vector<32x128xf32> to vector<16x128xf32>
    %45 = arith.subf %43, %44 : vector<16x128xf32>
    %46 = vector.extract_strided_slice %42 {offsets = [0, 0], sizes = [16, 128], strides = [1, 1]} : vector<32x128xf32> to vector<16x128xf32>
    %47 = vector.extract_strided_slice %41 {offsets = [16, 0], sizes = [16, 128], strides = [1, 1]} : vector<32x128xf32> to vector<16x128xf32>
    %48 = arith.addf %46, %47 : vector<16x128xf32>
    %49 = tpu.concatenate %45, %48 in 0 : vector<16x128xf32>, vector<16x128xf32> -> vector<32x128xf32>
    %50 = arith.mulf %49, %17 : vector<32x128xf32>
    %51 = vector.extract_strided_slice %49 {offsets = [16, 0], sizes = [16, 128], strides = [1, 1]} : vector<32x128xf32> to vector<16x128xf32>
    %52 = vector.extract_strided_slice %49 {offsets = [0, 0], sizes = [16, 128], strides = [1, 1]} : vector<32x128xf32> to vector<16x128xf32>
    %53 = tpu.concatenate %51, %52 in 0 : vector<16x128xf32>, vector<16x128xf32> -> vector<32x128xf32>
    %54 = arith.mulf %53, %19 : vector<32x128xf32>
    %55 = arith.addf %50, %54 : vector<32x128xf32>
    %cst_55 = arith.constant dense<0.000000e+00> : vector<32x128xf32>
    %56 = tpu.matmul %7, %55, %cst_55 {dimension_numbers = #tpu.dot_dimension_numbers<[1], [0], [0], [1], [0, 0, 1, 1], [], []>} : vector<32x32xf32>, vector<32x128xf32>, vector<32x128xf32> -> vector<32x128xf32>
    %cst_56 = arith.constant dense<0.000000e+00> : vector<32x128xf32>
    %57 = tpu.matmul %56, %13, %cst_56 {dimension_numbers = #tpu.dot_dimension_numbers<[1], [0], [0], [1], [0, 0, 1, 1], [], []>} : vector<32x128xf32>, vector<128x128xf32>, vector<32x128xf32> -> vector<32x128xf32>
    %cst_57 = arith.constant dense<0.000000e+00> : vector<32x128xf32>
    %58 = tpu.matmul %56, %15, %cst_57 {dimension_numbers = #tpu.dot_dimension_numbers<[1], [0], [0], [1], [0, 0, 1, 1], [], []>} : vector<32x128xf32>, vector<128x128xf32>, vector<32x128xf32> -> vector<32x128xf32>
    %59 = vector.extract_strided_slice %57 {offsets = [0, 0], sizes = [16, 128], strides = [1, 1]} : vector<32x128xf32> to vector<16x128xf32>
    %60 = vector.extract_strided_slice %58 {offsets = [16, 0], sizes = [16, 128], strides = [1, 1]} : vector<32x128xf32> to vector<16x128xf32>
    %61 = arith.subf %59, %60 : vector<16x128xf32>
    %62 = vector.extract_strided_slice %58 {offsets = [0, 0], sizes = [16, 128], strides = [1, 1]} : vector<32x128xf32> to vector<16x128xf32>
    %63 = vector.extract_strided_slice %57 {offsets = [16, 0], sizes = [16, 128], strides = [1, 1]} : vector<32x128xf32> to vector<16x128xf32>
    %64 = arith.addf %62, %63 : vector<16x128xf32>
    %65 = tpu.concatenate %61, %64 in 0 : vector<16x128xf32>, vector<16x128xf32> -> vector<32x128xf32>
    %66 = vector.extract_strided_slice %65 {offsets = [0, 0], sizes = [16, 128], strides = [1, 1]} : vector<32x128xf32> to vector<16x128xf32>
    %67 = vector.extract_strided_slice %65 {offsets = [16, 0], sizes = [16, 128], strides = [1, 1]} : vector<32x128xf32> to vector<16x128xf32>
    %68 = arith.mulf %66, %66 : vector<16x128xf32>
    %69 = arith.mulf %67, %67 : vector<16x128xf32>
    %70 = arith.addf %68, %69 : vector<16x128xf32>
    %71 = math.sqrt %70 : vector<16x128xf32>
    %72 = vector.shape_cast %71 : vector<16x128xf32> to vector<1x16x128xf32>
    %cst_58 = arith.constant dense<0x7F800000> : vector<1xf32>
    %73 = vector.multi_reduction <minimumf>, %72, %cst_58 [1, 2] : vector<1x16x128xf32> to vector<1xf32>
    %74 = vector.shape_cast %73 : vector<1xf32> to vector<1x1x1xf32>
    %75 = vector.extract %74[0, 0, 0] : f32 from vector<1x1x1xf32>
    %76 = vector.shape_cast %71 : vector<16x128xf32> to vector<1x16x128xf32>
    %cst_59 = arith.constant dense<0xFF800000> : vector<1xf32>
    %77 = vector.multi_reduction <maximumf>, %76, %cst_59 [1, 2] : vector<1x16x128xf32> to vector<1xf32>
    %78 = vector.shape_cast %77 : vector<1xf32> to vector<1x1x1xf32>
    %79 = vector.extract %78[0, 0, 0] : f32 from vector<1x1x1xf32>
    %80 = arith.subf %79, %75 : f32
    %cst_60 = arith.constant 1.000000e+00 : f32
    %81 = vector.broadcast %cst_60 : f32 to vector<16x128xf32>
    %82 = vector.broadcast %80 : f32 to vector<16x128xf32>
    %83 = arith.mulf %82, %81 : vector<16x128xf32>
    %84 = tpu.reciprocal %83 {approx = true} : vector<16x128xf32> -> vector<16x128xf32>
    %85 = vector.broadcast %75 : f32 to vector<16x128xf32>
    %86 = arith.subf %71, %85 : vector<16x128xf32>
    %87 = arith.mulf %86, %84 : vector<16x128xf32>
    %88 = arith.subf %1, %3 : vector<16x128xf32>
    %89 = vector.broadcast %38 : f32 to vector<16x128xf32>
    %90 = arith.mulf %89, %88 : vector<16x128xf32>
    %91 = arith.addf %87, %90 : vector<16x128xf32>
    %cst_61 = arith.constant dense<0.000000e+00> : vector<32x128xf32>
    %92 = tpu.matmul %6, %91, %cst_61 {dimension_numbers = #tpu.dot_dimension_numbers<[1], [0], [0], [1], [0, 0, 1, 1], [], []>} : vector<32x16xf32>, vector<16x128xf32>, vector<32x128xf32> -> vector<32x128xf32>
    %cst_62 = arith.constant dense<0.000000e+00> : vector<32x128xf32>
    %93 = tpu.matmul %92, %9, %cst_62 {dimension_numbers = #tpu.dot_dimension_numbers<[1], [0], [0], [1], [0, 0, 1, 1], [], []>} : vector<32x128xf32>, vector<128x128xf32>, vector<32x128xf32> -> vector<32x128xf32>
    %cst_63 = arith.constant dense<0.000000e+00> : vector<32x128xf32>
    %94 = tpu.matmul %92, %11, %cst_63 {dimension_numbers = #tpu.dot_dimension_numbers<[1], [0], [0], [1], [0, 0, 1, 1], [], []>} : vector<32x128xf32>, vector<128x128xf32>, vector<32x128xf32> -> vector<32x128xf32>
    %95 = vector.extract_strided_slice %93 {offsets = [0, 0], sizes = [16, 128], strides = [1, 1]} : vector<32x128xf32> to vector<16x128xf32>
    %96 = vector.extract_strided_slice %94 {offsets = [16, 0], sizes = [16, 128], strides = [1, 1]} : vector<32x128xf32> to vector<16x128xf32>
    %97 = arith.subf %95, %96 : vector<16x128xf32>
    %98 = vector.extract_strided_slice %94 {offsets = [0, 0], sizes = [16, 128], strides = [1, 1]} : vector<32x128xf32> to vector<16x128xf32>
    %99 = vector.extract_strided_slice %93 {offsets = [16, 0], sizes = [16, 128], strides = [1, 1]} : vector<32x128xf32> to vector<16x128xf32>
    %100 = arith.addf %98, %99 : vector<16x128xf32>
    %101 = tpu.concatenate %97, %100 in 0 : vector<16x128xf32>, vector<16x128xf32> -> vector<32x128xf32>
    %102 = arith.mulf %101, %21 : vector<32x128xf32>
    %103 = vector.extract_strided_slice %101 {offsets = [16, 0], sizes = [16, 128], strides = [1, 1]} : vector<32x128xf32> to vector<16x128xf32>
    %104 = vector.extract_strided_slice %101 {offsets = [0, 0], sizes = [16, 128], strides = [1, 1]} : vector<32x128xf32> to vector<16x128xf32>
    %105 = tpu.concatenate %103, %104 in 0 : vector<16x128xf32>, vector<16x128xf32> -> vector<32x128xf32>
    %106 = arith.mulf %105, %23 : vector<32x128xf32>
    %107 = arith.addf %102, %106 : vector<32x128xf32>
    %108 = arith.mulf %107, %25 : vector<32x128xf32>
    %cst_64 = arith.constant dense<0.000000e+00> : vector<32x128xf32>
    %109 = tpu.matmul %7, %108, %cst_64 {dimension_numbers = #tpu.dot_dimension_numbers<[1], [0], [0], [1], [0, 0, 1, 1], [], []>} : vector<32x32xf32>, vector<32x128xf32>, vector<32x128xf32> -> vector<32x128xf32>
    %cst_65 = arith.constant dense<0.000000e+00> : vector<32x128xf32>
    %110 = tpu.matmul %109, %13, %cst_65 {dimension_numbers = #tpu.dot_dimension_numbers<[1], [0], [0], [1], [0, 0, 1, 1], [], []>} : vector<32x128xf32>, vector<128x128xf32>, vector<32x128xf32> -> vector<32x128xf32>
    %cst_66 = arith.constant dense<0.000000e+00> : vector<32x128xf32>
    %111 = tpu.matmul %109, %15, %cst_66 {dimension_numbers = #tpu.dot_dimension_numbers<[1], [0], [0], [1], [0, 0, 1, 1], [], []>} : vector<32x128xf32>, vector<128x128xf32>, vector<32x128xf32> -> vector<32x128xf32>
    %112 = vector.extract_strided_slice %110 {offsets = [0, 0], sizes = [16, 128], strides = [1, 1]} : vector<32x128xf32> to vector<16x128xf32>
    %113 = vector.extract_strided_slice %111 {offsets = [16, 0], sizes = [16, 128], strides = [1, 1]} : vector<32x128xf32> to vector<16x128xf32>
    %114 = arith.subf %112, %113 : vector<16x128xf32>
    %115 = vector.extract_strided_slice %111 {offsets = [0, 0], sizes = [16, 128], strides = [1, 1]} : vector<32x128xf32> to vector<16x128xf32>
    %116 = vector.extract_strided_slice %110 {offsets = [16, 0], sizes = [16, 128], strides = [1, 1]} : vector<32x128xf32> to vector<16x128xf32>
    %117 = arith.addf %115, %116 : vector<16x128xf32>
    %118 = tpu.concatenate %114, %117 in 0 : vector<16x128xf32>, vector<16x128xf32> -> vector<32x128xf32>
    %119 = vector.extract_strided_slice %118 {offsets = [0, 0], sizes = [16, 128], strides = [1, 1]} : vector<32x128xf32> to vector<16x128xf32>
    %120 = vector.extract_strided_slice %118 {offsets = [16, 0], sizes = [16, 128], strides = [1, 1]} : vector<32x128xf32> to vector<16x128xf32>
    %121 = arith.mulf %119, %119 : vector<16x128xf32>
    %122 = arith.mulf %120, %120 : vector<16x128xf32>
    %123 = arith.addf %121, %122 : vector<16x128xf32>
    %124 = math.sqrt %123 : vector<16x128xf32>
    %125 = arith.addf %124, %3 : vector<16x128xf32>
    %126 = vector.shape_cast %125 : vector<16x128xf32> to vector<1x16x128xf32>
    %cst_67 = arith.constant dense<0x7F800000> : vector<1xf32>
    %127 = vector.multi_reduction <minimumf>, %126, %cst_67 [1, 2] : vector<1x16x128xf32> to vector<1xf32>
    %128 = vector.shape_cast %127 : vector<1xf32> to vector<1x1x1xf32>
    %129 = vector.extract %128[0, 0, 0] : f32 from vector<1x1x1xf32>
    %130 = vector.shape_cast %125 : vector<16x128xf32> to vector<1x16x128xf32>
    %cst_68 = arith.constant dense<0xFF800000> : vector<1xf32>
    %131 = vector.multi_reduction <maximumf>, %130, %cst_68 [1, 2] : vector<1x16x128xf32> to vector<1xf32>
    %132 = vector.shape_cast %131 : vector<1xf32> to vector<1x1x1xf32>
    %133 = vector.extract %132[0, 0, 0] : f32 from vector<1x1x1xf32>
    %134 = arith.subf %133, %129 : f32
    %cst_69 = arith.constant 1.000000e+00 : f32
    %135 = vector.broadcast %cst_69 : f32 to vector<16x128xf32>
    %136 = vector.broadcast %134 : f32 to vector<16x128xf32>
    %137 = arith.mulf %136, %135 : vector<16x128xf32>
    %138 = tpu.reciprocal %137 {approx = true} : vector<16x128xf32> -> vector<16x128xf32>
    %139 = vector.broadcast %129 : f32 to vector<16x128xf32>
    %140 = arith.subf %125, %139 : vector<16x128xf32>
    %141 = arith.mulf %140, %138 : vector<16x128xf32>
    %c0_70 = arith.constant 0 : index
    %142 = memref.load %arg8[%c0_70] : memref<64xf32, #tpu.memory_space<smem>>
    %c1_71 = arith.constant 1 : index
    %143 = memref.load %arg8[%c1_71] : memref<64xf32, #tpu.memory_space<smem>>
    %c2_72 = arith.constant 2 : index
    %144 = memref.load %arg8[%c2_72] : memref<64xf32, #tpu.memory_space<smem>>
    %c3_73 = arith.constant 3 : index
    %145 = memref.load %arg8[%c3_73] : memref<64xf32, #tpu.memory_space<smem>>
    %c4_74 = arith.constant 4 : index
    %146 = memref.load %arg8[%c4_74] : memref<64xf32, #tpu.memory_space<smem>>
    %c5 = arith.constant 5 : index
    %147 = memref.load %arg8[%c5] : memref<64xf32, #tpu.memory_space<smem>>
    %c6 = arith.constant 6 : index
    %148 = memref.load %arg8[%c6] : memref<64xf32, #tpu.memory_space<smem>>
    %c7 = arith.constant 7 : index
    %149 = memref.load %arg8[%c7] : memref<64xf32, #tpu.memory_space<smem>>
    %c8 = arith.constant 8 : index
    %150 = memref.load %arg8[%c8] : memref<64xf32, #tpu.memory_space<smem>>
    %cst_75 = arith.constant dense<0.000000e+00> : vector<16x128xf32>
    %151 = tpu.matmul %27, %141, %cst_75 {dimension_numbers = #tpu.dot_dimension_numbers<[1], [0], [0], [1], [0, 0, 1, 1], [], []>} : vector<16x16xf32>, vector<16x128xf32>, vector<16x128xf32> -> vector<16x128xf32>
    %cst_76 = arith.constant dense<0.000000e+00> : vector<16x128xf32>
    %152 = tpu.matmul %29, %141, %cst_76 {dimension_numbers = #tpu.dot_dimension_numbers<[1], [0], [0], [1], [0, 0, 1, 1], [], []>} : vector<16x16xf32>, vector<16x128xf32>, vector<16x128xf32> -> vector<16x128xf32>
    %153 = vector.broadcast %142 : f32 to vector<16x128xf32>
    %154 = arith.mulf %153, %151 : vector<16x128xf32>
    %155 = vector.broadcast %145 : f32 to vector<16x128xf32>
    %156 = arith.mulf %155, %141 : vector<16x128xf32>
    %157 = arith.addf %154, %156 : vector<16x128xf32>
    %158 = vector.broadcast %148 : f32 to vector<16x128xf32>
    %159 = arith.mulf %158, %152 : vector<16x128xf32>
    %160 = arith.addf %157, %159 : vector<16x128xf32>
    %161 = vector.broadcast %143 : f32 to vector<16x128xf32>
    %162 = arith.mulf %161, %151 : vector<16x128xf32>
    %163 = vector.broadcast %146 : f32 to vector<16x128xf32>
    %164 = arith.mulf %163, %141 : vector<16x128xf32>
    %165 = arith.addf %162, %164 : vector<16x128xf32>
    %166 = vector.broadcast %149 : f32 to vector<16x128xf32>
    %167 = arith.mulf %166, %152 : vector<16x128xf32>
    %168 = arith.addf %165, %167 : vector<16x128xf32>
    %169 = vector.broadcast %144 : f32 to vector<16x128xf32>
    %170 = arith.mulf %169, %151 : vector<16x128xf32>
    %171 = vector.broadcast %147 : f32 to vector<16x128xf32>
    %172 = arith.mulf %171, %141 : vector<16x128xf32>
    %173 = arith.addf %170, %172 : vector<16x128xf32>
    %174 = vector.broadcast %150 : f32 to vector<16x128xf32>
    %175 = arith.mulf %174, %152 : vector<16x128xf32>
    %176 = arith.addf %173, %175 : vector<16x128xf32>
    %cst_77 = arith.constant dense<0.000000e+00> : vector<16x128xf32>
    %177 = tpu.matmul %160, %35, %cst_77 {dimension_numbers = #tpu.dot_dimension_numbers<[1], [0], [0], [1], [0, 0, 1, 1], [], []>} : vector<16x128xf32>, vector<128x128xf32>, vector<16x128xf32> -> vector<16x128xf32>
    %178 = arith.addf %177, %168 : vector<16x128xf32>
    %cst_78 = arith.constant dense<0.000000e+00> : vector<16x128xf32>
    %179 = tpu.matmul %176, %37, %cst_78 {dimension_numbers = #tpu.dot_dimension_numbers<[1], [0], [0], [1], [0, 0, 1, 1], [], []>} : vector<16x128xf32>, vector<128x128xf32>, vector<16x128xf32> -> vector<16x128xf32>
    %180 = arith.addf %178, %179 : vector<16x128xf32>
    %c36 = arith.constant 36 : index
    %181 = memref.load %arg8[%c36] : memref<64xf32, #tpu.memory_space<smem>>
    %182 = vector.broadcast %181 : f32 to vector<16x128xf32>
    %183 = arith.mulf %180, %182 : vector<16x128xf32>
    %c37 = arith.constant 37 : index
    %184 = memref.load %arg8[%c37] : memref<64xf32, #tpu.memory_space<smem>>
    %185 = vector.broadcast %184 : f32 to vector<16x128xf32>
    %186 = arith.addf %183, %185 : vector<16x128xf32>
    %cst_79 = arith.constant 0.000000e+00 : f32
    %187 = vector.broadcast %cst_79 : f32 to vector<16x128xf32>
    %188 = arith.cmpf ogt, %186, %187 : vector<16x128xf32>
    %cst_80 = arith.constant 0.00999999977 : f32
    %189 = vector.broadcast %cst_80 : f32 to vector<16x128xf32>
    %190 = arith.mulf %189, %186 : vector<16x128xf32>
    %191 = arith.select %188, %186, %190 : vector<16x128xi1>, vector<16x128xf32>
    %c9 = arith.constant 9 : index
    %192 = memref.load %arg8[%c9] : memref<64xf32, #tpu.memory_space<smem>>
    %c10 = arith.constant 10 : index
    %193 = memref.load %arg8[%c10] : memref<64xf32, #tpu.memory_space<smem>>
    %c11 = arith.constant 11 : index
    %194 = memref.load %arg8[%c11] : memref<64xf32, #tpu.memory_space<smem>>
    %c12 = arith.constant 12 : index
    %195 = memref.load %arg8[%c12] : memref<64xf32, #tpu.memory_space<smem>>
    %c13 = arith.constant 13 : index
    %196 = memref.load %arg8[%c13] : memref<64xf32, #tpu.memory_space<smem>>
    %c14 = arith.constant 14 : index
    %197 = memref.load %arg8[%c14] : memref<64xf32, #tpu.memory_space<smem>>
    %c15 = arith.constant 15 : index
    %198 = memref.load %arg8[%c15] : memref<64xf32, #tpu.memory_space<smem>>
    %c16 = arith.constant 16 : index
    %199 = memref.load %arg8[%c16] : memref<64xf32, #tpu.memory_space<smem>>
    %c17 = arith.constant 17 : index
    %200 = memref.load %arg8[%c17] : memref<64xf32, #tpu.memory_space<smem>>
    %cst_81 = arith.constant dense<0.000000e+00> : vector<16x128xf32>
    %201 = tpu.matmul %27, %191, %cst_81 {dimension_numbers = #tpu.dot_dimension_numbers<[1], [0], [0], [1], [0, 0, 1, 1], [], []>} : vector<16x16xf32>, vector<16x128xf32>, vector<16x128xf32> -> vector<16x128xf32>
    %cst_82 = arith.constant dense<0.000000e+00> : vector<16x128xf32>
    %202 = tpu.matmul %29, %191, %cst_82 {dimension_numbers = #tpu.dot_dimension_numbers<[1], [0], [0], [1], [0, 0, 1, 1], [], []>} : vector<16x16xf32>, vector<16x128xf32>, vector<16x128xf32> -> vector<16x128xf32>
    %203 = vector.broadcast %192 : f32 to vector<16x128xf32>
    %204 = arith.mulf %203, %201 : vector<16x128xf32>
    %205 = vector.broadcast %195 : f32 to vector<16x128xf32>
    %206 = arith.mulf %205, %191 : vector<16x128xf32>
    %207 = arith.addf %204, %206 : vector<16x128xf32>
    %208 = vector.broadcast %198 : f32 to vector<16x128xf32>
    %209 = arith.mulf %208, %202 : vector<16x128xf32>
    %210 = arith.addf %207, %209 : vector<16x128xf32>
    %211 = vector.broadcast %193 : f32 to vector<16x128xf32>
    %212 = arith.mulf %211, %201 : vector<16x128xf32>
    %213 = vector.broadcast %196 : f32 to vector<16x128xf32>
    %214 = arith.mulf %213, %191 : vector<16x128xf32>
    %215 = arith.addf %212, %214 : vector<16x128xf32>
    %216 = vector.broadcast %199 : f32 to vector<16x128xf32>
    %217 = arith.mulf %216, %202 : vector<16x128xf32>
    %218 = arith.addf %215, %217 : vector<16x128xf32>
    %219 = vector.broadcast %194 : f32 to vector<16x128xf32>
    %220 = arith.mulf %219, %201 : vector<16x128xf32>
    %221 = vector.broadcast %197 : f32 to vector<16x128xf32>
    %222 = arith.mulf %221, %191 : vector<16x128xf32>
    %223 = arith.addf %220, %222 : vector<16x128xf32>
    %224 = vector.broadcast %200 : f32 to vector<16x128xf32>
    %225 = arith.mulf %224, %202 : vector<16x128xf32>
    %226 = arith.addf %223, %225 : vector<16x128xf32>
    %cst_83 = arith.constant dense<0.000000e+00> : vector<16x128xf32>
    %227 = tpu.matmul %210, %35, %cst_83 {dimension_numbers = #tpu.dot_dimension_numbers<[1], [0], [0], [1], [0, 0, 1, 1], [], []>} : vector<16x128xf32>, vector<128x128xf32>, vector<16x128xf32> -> vector<16x128xf32>
    %228 = arith.addf %227, %218 : vector<16x128xf32>
    %cst_84 = arith.constant dense<0.000000e+00> : vector<16x128xf32>
    %229 = tpu.matmul %226, %37, %cst_84 {dimension_numbers = #tpu.dot_dimension_numbers<[1], [0], [0], [1], [0, 0, 1, 1], [], []>} : vector<16x128xf32>, vector<128x128xf32>, vector<16x128xf32> -> vector<16x128xf32>
    %230 = arith.addf %228, %229 : vector<16x128xf32>
    %c38 = arith.constant 38 : index
    %231 = memref.load %arg8[%c38] : memref<64xf32, #tpu.memory_space<smem>>
    %232 = vector.broadcast %231 : f32 to vector<16x128xf32>
    %233 = arith.mulf %230, %232 : vector<16x128xf32>
    %c39 = arith.constant 39 : index
    %234 = memref.load %arg8[%c39] : memref<64xf32, #tpu.memory_space<smem>>
    %235 = vector.broadcast %234 : f32 to vector<16x128xf32>
    %236 = arith.addf %233, %235 : vector<16x128xf32>
    %237 = arith.addf %141, %236 : vector<16x128xf32>
    %cst_85 = arith.constant 0.000000e+00 : f32
    %238 = vector.broadcast %cst_85 : f32 to vector<16x128xf32>
    %239 = arith.cmpf ogt, %237, %238 : vector<16x128xf32>
    %cst_86 = arith.constant 0.00999999977 : f32
    %240 = vector.broadcast %cst_86 : f32 to vector<16x128xf32>
    %241 = arith.mulf %240, %237 : vector<16x128xf32>
    %242 = arith.select %239, %237, %241 : vector<16x128xi1>, vector<16x128xf32>
    %cst_87 = arith.constant 0.000000e+00 : f32
    %243 = vector.broadcast %cst_87 : f32 to vector<16x128xf32>
    %244 = arith.cmpf ogt, %242, %243 : vector<16x128xf32>
    %cst_88 = arith.constant 0.000000e+00 : f32
    %245 = vector.broadcast %cst_88 : f32 to vector<16x128xf32>
    %246 = arith.cmpf olt, %242, %245 : vector<16x128xf32>
    %cst_89 = arith.constant -1.000000e+00 : f32
    %cst_90 = arith.constant 0.000000e+00 : f32
    %247 = vector.broadcast %cst_89 : f32 to vector<16x128xf32>
    %248 = vector.broadcast %cst_90 : f32 to vector<16x128xf32>
    %249 = arith.select %246, %247, %248 : vector<16x128xi1>, vector<16x128xf32>
    %cst_91 = arith.constant 1.000000e+00 : f32
    %250 = vector.broadcast %cst_91 : f32 to vector<16x128xf32>
    %251 = arith.select %244, %250, %249 : vector<16x128xi1>, vector<16x128xf32>
    %252 = math.absf %242 : vector<16x128xf32>
    %253 = vector.broadcast %39 : f32 to vector<16x128xf32>
    %254 = arith.subf %252, %253 : vector<16x128xf32>
    %cst_92 = arith.constant 0.000000e+00 : f32
    %255 = vector.broadcast %cst_92 : f32 to vector<16x128xf32>
    %256 = arith.maximumf %254, %255 : vector<16x128xf32>
    %257 = arith.mulf %251, %256 : vector<16x128xf32>
    %258 = tpu.concatenate %257, %242 in 0 : vector<16x128xf32>, vector<16x128xf32> -> vector<32x128xf32>
    %c18 = arith.constant 18 : index
    %259 = memref.load %arg8[%c18] : memref<64xf32, #tpu.memory_space<smem>>
    %c19 = arith.constant 19 : index
    %260 = memref.load %arg8[%c19] : memref<64xf32, #tpu.memory_space<smem>>
    %c20 = arith.constant 20 : index
    %261 = memref.load %arg8[%c20] : memref<64xf32, #tpu.memory_space<smem>>
    %c21 = arith.constant 21 : index
    %262 = memref.load %arg8[%c21] : memref<64xf32, #tpu.memory_space<smem>>
    %c22 = arith.constant 22 : index
    %263 = memref.load %arg8[%c22] : memref<64xf32, #tpu.memory_space<smem>>
    %c23 = arith.constant 23 : index
    %264 = memref.load %arg8[%c23] : memref<64xf32, #tpu.memory_space<smem>>
    %c24 = arith.constant 24 : index
    %265 = memref.load %arg8[%c24] : memref<64xf32, #tpu.memory_space<smem>>
    %c25 = arith.constant 25 : index
    %266 = memref.load %arg8[%c25] : memref<64xf32, #tpu.memory_space<smem>>
    %c26 = arith.constant 26 : index
    %267 = memref.load %arg8[%c26] : memref<64xf32, #tpu.memory_space<smem>>
    %cst_93 = arith.constant dense<0.000000e+00> : vector<32x128xf32>
    %268 = tpu.matmul %31, %258, %cst_93 {dimension_numbers = #tpu.dot_dimension_numbers<[1], [0], [0], [1], [0, 0, 1, 1], [], []>} : vector<32x32xf32>, vector<32x128xf32>, vector<32x128xf32> -> vector<32x128xf32>
    %cst_94 = arith.constant dense<0.000000e+00> : vector<32x128xf32>
    %269 = tpu.matmul %33, %258, %cst_94 {dimension_numbers = #tpu.dot_dimension_numbers<[1], [0], [0], [1], [0, 0, 1, 1], [], []>} : vector<32x32xf32>, vector<32x128xf32>, vector<32x128xf32> -> vector<32x128xf32>
    %270 = vector.broadcast %259 : f32 to vector<32x128xf32>
    %271 = arith.mulf %270, %268 : vector<32x128xf32>
    %272 = vector.broadcast %262 : f32 to vector<32x128xf32>
    %273 = arith.mulf %272, %258 : vector<32x128xf32>
    %274 = arith.addf %271, %273 : vector<32x128xf32>
    %275 = vector.broadcast %265 : f32 to vector<32x128xf32>
    %276 = arith.mulf %275, %269 : vector<32x128xf32>
    %277 = arith.addf %274, %276 : vector<32x128xf32>
    %278 = vector.broadcast %260 : f32 to vector<32x128xf32>
    %279 = arith.mulf %278, %268 : vector<32x128xf32>
    %280 = vector.broadcast %263 : f32 to vector<32x128xf32>
    %281 = arith.mulf %280, %258 : vector<32x128xf32>
    %282 = arith.addf %279, %281 : vector<32x128xf32>
    %283 = vector.broadcast %266 : f32 to vector<32x128xf32>
    %284 = arith.mulf %283, %269 : vector<32x128xf32>
    %285 = arith.addf %282, %284 : vector<32x128xf32>
    %286 = vector.broadcast %261 : f32 to vector<32x128xf32>
    %287 = arith.mulf %286, %268 : vector<32x128xf32>
    %288 = vector.broadcast %264 : f32 to vector<32x128xf32>
    %289 = arith.mulf %288, %258 : vector<32x128xf32>
    %290 = arith.addf %287, %289 : vector<32x128xf32>
    %291 = vector.broadcast %267 : f32 to vector<32x128xf32>
    %292 = arith.mulf %291, %269 : vector<32x128xf32>
    %293 = arith.addf %290, %292 : vector<32x128xf32>
    %cst_95 = arith.constant dense<0.000000e+00> : vector<32x128xf32>
    %294 = tpu.matmul %277, %35, %cst_95 {dimension_numbers = #tpu.dot_dimension_numbers<[1], [0], [0], [1], [0, 0, 1, 1], [], []>} : vector<32x128xf32>, vector<128x128xf32>, vector<32x128xf32> -> vector<32x128xf32>
    %295 = arith.addf %294, %285 : vector<32x128xf32>
    %cst_96 = arith.constant dense<0.000000e+00> : vector<32x128xf32>
    %296 = tpu.matmul %293, %37, %cst_96 {dimension_numbers = #tpu.dot_dimension_numbers<[1], [0], [0], [1], [0, 0, 1, 1], [], []>} : vector<32x128xf32>, vector<128x128xf32>, vector<32x128xf32> -> vector<32x128xf32>
    %297 = arith.addf %295, %296 : vector<32x128xf32>
    %c40 = arith.constant 40 : index
    %298 = memref.load %arg8[%c40] : memref<64xf32, #tpu.memory_space<smem>>
    %299 = vector.broadcast %298 : f32 to vector<32x128xf32>
    %300 = arith.mulf %297, %299 : vector<32x128xf32>
    %c41 = arith.constant 41 : index
    %301 = memref.load %arg8[%c41] : memref<64xf32, #tpu.memory_space<smem>>
    %302 = vector.broadcast %301 : f32 to vector<32x128xf32>
    %303 = arith.addf %300, %302 : vector<32x128xf32>
    %cst_97 = arith.constant 0.000000e+00 : f32
    %304 = vector.broadcast %cst_97 : f32 to vector<32x128xf32>
    %305 = arith.cmpf ogt, %303, %304 : vector<32x128xf32>
    %cst_98 = arith.constant 0.00999999977 : f32
    %306 = vector.broadcast %cst_98 : f32 to vector<32x128xf32>
    %307 = arith.mulf %306, %303 : vector<32x128xf32>
    %308 = arith.select %305, %303, %307 : vector<32x128xi1>, vector<32x128xf32>
    %c27 = arith.constant 27 : index
    %309 = memref.load %arg8[%c27] : memref<64xf32, #tpu.memory_space<smem>>
    %c28 = arith.constant 28 : index
    %310 = memref.load %arg8[%c28] : memref<64xf32, #tpu.memory_space<smem>>
    %c29 = arith.constant 29 : index
    %311 = memref.load %arg8[%c29] : memref<64xf32, #tpu.memory_space<smem>>
    %c30 = arith.constant 30 : index
    %312 = memref.load %arg8[%c30] : memref<64xf32, #tpu.memory_space<smem>>
    %c31 = arith.constant 31 : index
    %313 = memref.load %arg8[%c31] : memref<64xf32, #tpu.memory_space<smem>>
    %c32 = arith.constant 32 : index
    %314 = memref.load %arg8[%c32] : memref<64xf32, #tpu.memory_space<smem>>
    %c33 = arith.constant 33 : index
    %315 = memref.load %arg8[%c33] : memref<64xf32, #tpu.memory_space<smem>>
    %c34 = arith.constant 34 : index
    %316 = memref.load %arg8[%c34] : memref<64xf32, #tpu.memory_space<smem>>
    %c35 = arith.constant 35 : index
    %317 = memref.load %arg8[%c35] : memref<64xf32, #tpu.memory_space<smem>>
    %cst_99 = arith.constant dense<0.000000e+00> : vector<32x128xf32>
    %318 = tpu.matmul %31, %308, %cst_99 {dimension_numbers = #tpu.dot_dimension_numbers<[1], [0], [0], [1], [0, 0, 1, 1], [], []>} : vector<32x32xf32>, vector<32x128xf32>, vector<32x128xf32> -> vector<32x128xf32>
    %cst_100 = arith.constant dense<0.000000e+00> : vector<32x128xf32>
    %319 = tpu.matmul %33, %308, %cst_100 {dimension_numbers = #tpu.dot_dimension_numbers<[1], [0], [0], [1], [0, 0, 1, 1], [], []>} : vector<32x32xf32>, vector<32x128xf32>, vector<32x128xf32> -> vector<32x128xf32>
    %320 = vector.broadcast %309 : f32 to vector<32x128xf32>
    %321 = arith.mulf %320, %318 : vector<32x128xf32>
    %322 = vector.broadcast %312 : f32 to vector<32x128xf32>
    %323 = arith.mulf %322, %308 : vector<32x128xf32>
    %324 = arith.addf %321, %323 : vector<32x128xf32>
    %325 = vector.broadcast %315 : f32 to vector<32x128xf32>
    %326 = arith.mulf %325, %319 : vector<32x128xf32>
    %327 = arith.addf %324, %326 : vector<32x128xf32>
    %328 = vector.broadcast %310 : f32 to vector<32x128xf32>
    %329 = arith.mulf %328, %318 : vector<32x128xf32>
    %330 = vector.broadcast %313 : f32 to vector<32x128xf32>
    %331 = arith.mulf %330, %308 : vector<32x128xf32>
    %332 = arith.addf %329, %331 : vector<32x128xf32>
    %333 = vector.broadcast %316 : f32 to vector<32x128xf32>
    %334 = arith.mulf %333, %319 : vector<32x128xf32>
    %335 = arith.addf %332, %334 : vector<32x128xf32>
    %336 = vector.broadcast %311 : f32 to vector<32x128xf32>
    %337 = arith.mulf %336, %318 : vector<32x128xf32>
    %338 = vector.broadcast %314 : f32 to vector<32x128xf32>
    %339 = arith.mulf %338, %308 : vector<32x128xf32>
    %340 = arith.addf %337, %339 : vector<32x128xf32>
    %341 = vector.broadcast %317 : f32 to vector<32x128xf32>
    %342 = arith.mulf %341, %319 : vector<32x128xf32>
    %343 = arith.addf %340, %342 : vector<32x128xf32>
    %cst_101 = arith.constant dense<0.000000e+00> : vector<32x128xf32>
    %344 = tpu.matmul %327, %35, %cst_101 {dimension_numbers = #tpu.dot_dimension_numbers<[1], [0], [0], [1], [0, 0, 1, 1], [], []>} : vector<32x128xf32>, vector<128x128xf32>, vector<32x128xf32> -> vector<32x128xf32>
    %345 = arith.addf %344, %335 : vector<32x128xf32>
    %cst_102 = arith.constant dense<0.000000e+00> : vector<32x128xf32>
    %346 = tpu.matmul %343, %37, %cst_102 {dimension_numbers = #tpu.dot_dimension_numbers<[1], [0], [0], [1], [0, 0, 1, 1], [], []>} : vector<32x128xf32>, vector<128x128xf32>, vector<32x128xf32> -> vector<32x128xf32>
    %347 = arith.addf %345, %346 : vector<32x128xf32>
    %c42 = arith.constant 42 : index
    %348 = memref.load %arg8[%c42] : memref<64xf32, #tpu.memory_space<smem>>
    %349 = vector.broadcast %348 : f32 to vector<32x128xf32>
    %350 = arith.mulf %347, %349 : vector<32x128xf32>
    %c43 = arith.constant 43 : index
    %351 = memref.load %arg8[%c43] : memref<64xf32, #tpu.memory_space<smem>>
    %352 = vector.broadcast %351 : f32 to vector<32x128xf32>
    %353 = arith.addf %350, %352 : vector<32x128xf32>
    %354 = arith.addf %258, %353 : vector<32x128xf32>
    %cst_103 = arith.constant 0.000000e+00 : f32
    %355 = vector.broadcast %cst_103 : f32 to vector<32x128xf32>
    %356 = arith.cmpf ogt, %354, %355 : vector<32x128xf32>
    %cst_104 = arith.constant 0.00999999977 : f32
    %357 = vector.broadcast %cst_104 : f32 to vector<32x128xf32>
    %358 = arith.mulf %357, %354 : vector<32x128xf32>
    %359 = arith.select %356, %354, %358 : vector<32x128xi1>, vector<32x128xf32>
    %360 = vector.extract_strided_slice %359 {offsets = [0, 0], sizes = [16, 128], strides = [1, 1]} : vector<32x128xf32> to vector<16x128xf32>
    %361 = vector.extract_strided_slice %359 {offsets = [16, 0], sizes = [16, 128], strides = [1, 1]} : vector<32x128xf32> to vector<16x128xf32>
    %362 = arith.subf %361, %141 : vector<16x128xf32>
    %363 = vector.shape_cast %360 : vector<16x128xf32> to vector<1x16x128xf32>
    %cst_105 = arith.constant dense<0x7F800000> : vector<1xf32>
    %364 = vector.multi_reduction <minimumf>, %363, %cst_105 [1, 2] : vector<1x16x128xf32> to vector<1xf32>
    %365 = vector.shape_cast %364 : vector<1xf32> to vector<1x1x1xf32>
    %366 = vector.extract %365[0, 0, 0] : f32 from vector<1x1x1xf32>
    %367 = vector.shape_cast %360 : vector<16x128xf32> to vector<1x16x128xf32>
    %cst_106 = arith.constant dense<0xFF800000> : vector<1xf32>
    %368 = vector.multi_reduction <maximumf>, %367, %cst_106 [1, 2] : vector<1x16x128xf32> to vector<1xf32>
    %369 = vector.shape_cast %368 : vector<1xf32> to vector<1x1x1xf32>
    %370 = vector.extract %369[0, 0, 0] : f32 from vector<1x1x1xf32>
    %371 = arith.subf %370, %366 : f32
    %cst_107 = arith.constant 1.000000e+00 : f32
    %372 = vector.broadcast %cst_107 : f32 to vector<16x128xf32>
    %373 = vector.broadcast %371 : f32 to vector<16x128xf32>
    %374 = arith.mulf %373, %372 : vector<16x128xf32>
    %375 = tpu.reciprocal %374 {approx = true} : vector<16x128xf32> -> vector<16x128xf32>
    %376 = vector.broadcast %366 : f32 to vector<16x128xf32>
    %377 = arith.subf %360, %376 : vector<16x128xf32>
    %378 = arith.mulf %377, %375 : vector<16x128xf32>
    %379 = arith.subf %133, %129 : f32
    %380 = vector.broadcast %379 : f32 to vector<16x128xf32>
    %381 = arith.mulf %380, %378 : vector<16x128xf32>
    %382 = vector.broadcast %129 : f32 to vector<16x128xf32>
    %383 = arith.addf %382, %381 : vector<16x128xf32>
    %384 = arith.subf %124, %383 : vector<16x128xf32>
    %385 = arith.addf %3, %384 : vector<16x128xf32>
    %c0_108 = arith.constant 0 : index
    %c0_109 = arith.constant 0 : index
    %386 = vector.load %arg9[%c0_108, %c0_109] : memref<16x512xf32, #tpu.memory_space<vmem>>, vector<16x128xf32>
    tpu.vector_store %arg9[%c0_108, %c0_109], %124 {strides = array<i32>} : memref<16x512xf32, #tpu.memory_space<vmem>>, vector<16x128xf32>,
    %c0_110 = arith.constant 0 : index
    %c128 = arith.constant 128 : index
    %387 = vector.load %arg9[%c0_110, %c128] : memref<16x512xf32, #tpu.memory_space<vmem>>, vector<16x128xf32>
    tpu.vector_store %arg9[%c0_110, %c128], %383 {strides = array<i32>} : memref<16x512xf32, #tpu.memory_space<vmem>>, vector<16x128xf32>,
    %c0_111 = arith.constant 0 : index
    %c256 = arith.constant 256 : index
    %388 = vector.load %arg9[%c0_111, %c256] : memref<16x512xf32, #tpu.memory_space<vmem>>, vector<16x128xf32>
    tpu.vector_store %arg9[%c0_111, %c256], %385 {strides = array<i32>} : memref<16x512xf32, #tpu.memory_space<vmem>>, vector<16x128xf32>,
    %c0_112 = arith.constant 0 : index
    %c384 = arith.constant 384 : index
    %389 = vector.load %arg9[%c0_112, %c384] : memref<16x512xf32, #tpu.memory_space<vmem>>, vector<16x128xf32>
    tpu.vector_store %arg9[%c0_112, %c384], %362 {strides = array<i32>} : memref<16x512xf32, #tpu.memory_space<vmem>>, vector<16x128xf32>,
    return
  }
}

</mosaic_0001>

<llo_original>
// kernel: tpu_custom_call.1
$region0: #{tpu_custom_call.1}
  #allocation0 [shape = 'u32[]', space=smem, size = 0x4, offset = 0x4, fixed_abs, tag = 'smem constant byte address 0x4 - core index']
  #allocation1 [shape = 'u32[72,128]{1,0:T(1,128)}', space=vmem, size = 0x9000, scoped, tag = 'internal scratch']
  %s0 = inlined_call_operand.vmem [shape: f32[3,16,128], index: 0, kind: input, shape index: {}]
  %s1 = inlined_call_operand.vmem [shape: f32[32,16], index: 1, kind: input, shape index: {}]
  %s2 = inlined_call_operand.hbm [shape: f32[32,32], index: 2, kind: input, shape index: {}]
  %s3 = inlined_call_operand.hbm [shape: f32[4,128,128], index: 3, kind: input, shape index: {}]
  %s4 = inlined_call_operand.hbm [shape: f32[5,32,128], index: 4, kind: input, shape index: {}]
  %s5 = inlined_call_operand.hbm [shape: f32[2,16,16], index: 5, kind: input, shape index: {}]
  %s6 = inlined_call_operand.hbm [shape: f32[2,32,32], index: 6, kind: input, shape index: {}]
  %s7 = inlined_call_operand.hbm [shape: f32[2,128,128], index: 7, kind: input, shape index: {}]
  %s8 = inlined_call_operand.vmem [shape: f32[64], index: 8, kind: input, shape index: {}]
  %s9 = inlined_call_operand.hbm [shape: f32[16,512], index: 9, kind: output, shape index: {}]
  %s10 = sld [smem:[#allocation0]]
  $region74: #{tpu_custom_call.1} parent=0
    _
  %s12 = ssub.s32 1, %s10
  %s13 = scalar_select 0, %s12, %s10
  $region1: #{tpu_custom_call.1} parent=0
    #allocation2 [shape = 'u8[16384]{0}', space=vmem, size = 0x4000, scoped, tag = 'input window, operand 2, single buffered']
    #allocation3 [shape = 's32[1]{0}', space=sflag, size = 0x4, scoped, tag = 'scoped memory for tpu_custom_call.1']
    #allocation4 [shape = 's32[1]{0}', space=sflag, size = 0x4, scoped, tag = 'scoped memory for tpu_custom_call.1']
    #allocation5 [shape = 's32[1]{0}', space=sflag, size = 0x4, scoped, tag = 'scoped memory for tpu_custom_call.1']
    #allocation6 [shape = 'u8[262144]{0}', space=vmem, size = 0x40000, scoped, tag = 'input window, operand 3, single buffered']
    #allocation7 [shape = 's32[1]{0}', space=sflag, size = 0x4, scoped, tag = 'scoped memory for tpu_custom_call.1']
    #allocation8 [shape = 'u8[81920]{0}', space=vmem, size = 0x14000, scoped, tag = 'input window, operand 4, single buffered']
    #allocation9 [shape = 'u8[16384]{0}', space=vmem, size = 0x4000, scoped, tag = 'input window, operand 5, single buffered']
    #allocation10 [shape = 's32[1]{0}', space=sflag, size = 0x4, scoped, tag = 'scoped memory for tpu_custom_call.1']
    #allocation11 [shape = 'u8[32768]{0}', space=vmem, size = 0x8000, scoped, tag = 'input window, operand 6, single buffered']
    #allocation12 [shape = 'u8[131072]{0}', space=vmem, size = 0x20000, scoped, tag = 'input window, operand 7, single buffered']
    #allocation13 [shape = 's32[1]{0}', space=sflag, size = 0x4, scoped, tag = 'scoped memory for tpu_custom_call.1']
    #allocation14 [shape = 'u8[512]{0}', space=smem, size = 0x200, scoped, tag = 'input window, operand 8, single buffered']
    #allocation15 [shape = 'u8[32768]{0}', space=vmem, size = 0x8000, scoped, tag = 'output window, operand 0, single buffered']
    %14 = vsyncpa [#allocation3], 0
    %15 = vsyncpa [#allocation7], 0
    %16 = vsyncpa [#allocation10], 0
    %17 = vsyncpa [#allocation13], 0
    %18 = vsyncpa [#allocation5], 0
    %19 = vsyncpa [#allocation4], 0
    // Predicated region
    $region2: #{tpu_custom_call.1} parent=1 // pred_check
      _
    $region3: #{tpu_custom_call.1} parent=1 // pred_check_branch
      %21 = sbr.rel (0) target = $region5
    $region4: #{tpu_custom_call.1} parent=1 // pred_region
      _
    $region5: #{tpu_custom_call.1} parent=1 // pred_fallthru
      _
    // Predicated region
    $region6: #{tpu_custom_call.1} parent=1 // pred_check
      _
    $region7: #{tpu_custom_call.1} parent=1 // pred_check_branch
      %23 = sbr.rel (0) target = $region9
    $region8: #{tpu_custom_call.1} parent=1 // pred_region
      _
    $region9: #{tpu_custom_call.1} parent=1 // pred_fallthru
      _
    // Predicated region
    $region10: #{tpu_custom_call.1} parent=1 // pred_check
      _
    $region11: #{tpu_custom_call.1} parent=1 // pred_check_branch
      %25 = sbr.rel (0) target = $region13
    $region12: #{tpu_custom_call.1} parent=1 // pred_region
      %27 = vsyncadd [#allocation3], 0
      %s28 = sshll.u32 %s2, 4
      %s29 = int_to_ptr.hbm [resolvable:$true] %s28
      %s30 = sshll.u32 [#allocation2], 4
      %s31 = int_to_ptr.vmem [resolvable:$true] %s30
      %36 = dma.hbm_to_vmem [thread:$0]  %s29, 512, %s31, [#allocation3], 128, 128, 8
    $region13: #{tpu_custom_call.1} parent=1 // pred_fallthru
      _
    // Predicated region
    $region14: #{tpu_custom_call.1} parent=1 // pred_check
      _
    $region15: #{tpu_custom_call.1} parent=1 // pred_check_branch
      %38 = sbr.rel (0) target = $region17
    $region16: #{tpu_custom_call.1} parent=1 // pred_region
      %40 = vsyncadd [#allocation7], 0
      %s41 = sshll.u32 %s3, 4
      %s42 = int_to_ptr.hbm [resolvable:$true] %s41
      %s43 = sshll.u32 [#allocation6], 4
      %s44 = int_to_ptr.vmem [resolvable:$true] %s43
      %49 = dma.hbm_to_vmem [thread:$0]  %s42, 8192, %s44, [#allocation7], 128, 128, 8
    $region17: #{tpu_custom_call.1} parent=1 // pred_fallthru
      _
    // Predicated region
    $region18: #{tpu_custom_call.1} parent=1 // pred_check
      _
    $region19: #{tpu_custom_call.1} parent=1 // pred_check_branch
      %51 = sbr.rel (0) target = $region21
    $region20: #{tpu_custom_call.1} parent=1 // pred_region
      %53 = vsyncadd [#allocation7], 0
      %s54 = sshll.u32 %s4, 4
      %s55 = int_to_ptr.hbm [resolvable:$true] %s54
      %s56 = sshll.u32 [#allocation8], 4
      %s57 = int_to_ptr.vmem [resolvable:$true] %s56
      %62 = dma.hbm_to_vmem [thread:$0]  %s55, 2560, %s57, [#allocation7], 128, 128, 8
    $region21: #{tpu_custom_call.1} parent=1 // pred_fallthru
      _
    // Predicated region
    $region22: #{tpu_custom_call.1} parent=1 // pred_check
      _
    $region23: #{tpu_custom_call.1} parent=1 // pred_check_branch
      %64 = sbr.rel (0) target = $region25
    $region24: #{tpu_custom_call.1} parent=1 // pred_region
      %66 = vsyncadd [#allocation10], 0
      %s67 = sshll.u32 %s5, 4
      %s68 = int_to_ptr.hbm [resolvable:$true] %s67
      %s69 = sshll.u32 [#allocation9], 4
      %s70 = int_to_ptr.vmem [resolvable:$true] %s69
      %75 = dma.hbm_to_vmem [thread:$0]  %s68, 512, %s70, [#allocation10], 128, 128, 8
    $region25: #{tpu_custom_call.1} parent=1 // pred_fallthru
      _
    // Predicated region
    $region26: #{tpu_custom_call.1} parent=1 // pred_check
      _
    $region27: #{tpu_custom_call.1} parent=1 // pred_check_branch
      %77 = sbr.rel (0) target = $region29
    $region28: #{tpu_custom_call.1} parent=1 // pred_region
      %79 = vsyncadd [#allocation10], 0
      %s80 = sshll.u32 %s6, 4
      %s81 = int_to_ptr.hbm [resolvable:$true] %s80
      %s82 = sshll.u32 [#allocation11], 4
      %s83 = int_to_ptr.vmem [resolvable:$true] %s82
      %88 = dma.hbm_to_vmem [thread:$0]  %s81, 1024, %s83, [#allocation10], 128, 128, 8
    $region29: #{tpu_custom_call.1} parent=1 // pred_fallthru
      _
    // Predicated region
    $region30: #{tpu_custom_call.1} parent=1 // pred_check
      _
    $region31: #{tpu_custom_call.1} parent=1 // pred_check_branch
      %90 = sbr.rel (0) target = $region33
    $region32: #{tpu_custom_call.1} parent=1 // pred_region
      %92 = vsyncadd [#allocation13], 0
      %s93 = sshll.u32 %s7, 4
      %s94 = int_to_ptr.hbm [resolvable:$true] %s93
      %s95 = sshll.u32 [#allocation12], 4
      %s96 = int_to_ptr.vmem [resolvable:$true] %s95
      %101 = dma.hbm_to_vmem [thread:$0]  %s94, 4096, %s96, [#allocation13], 128, 128, 8
    $region33: #{tpu_custom_call.1} parent=1 // pred_fallthru
      _
    // Predicated region
    $region34: #{tpu_custom_call.1} parent=1 // pred_check
      _
    $region35: #{tpu_custom_call.1} parent=1 // pred_check_branch
      %103 = sbr.rel (0) target = $region37
    $region36: #{tpu_custom_call.1} parent=1 // pred_region
      %105 = vsyncadd [#allocation5], 0
      %s107 = sshll.u32 %s8, 4
      %s108 = int_to_ptr.vmem [resolvable:$true] %s107
      %110 = dma.vmem_to_smem %s108, 16, [#allocation14], [#allocation5]
    $region37: #{tpu_custom_call.1} parent=1 // pred_fallthru
      _
    // Predicated region
    $region38: #{tpu_custom_call.1} parent=1 // pred_check
      _
    $region39: #{tpu_custom_call.1} parent=1 // pred_check_branch
      %112 = sbr.rel (0) target = $region41
    $region40: #{tpu_custom_call.1} parent=1 // pred_region
      %114 = dma.done [#allocation3], 512
    $region41: #{tpu_custom_call.1} parent=1 // pred_fallthru
      _
    // Predicated region
    $region42: #{tpu_custom_call.1} parent=1 // pred_check
      _
    $region43: #{tpu_custom_call.1} parent=1 // pred_check_branch
      %116 = sbr.rel (0) target = $region45
    $region44: #{tpu_custom_call.1} parent=1 // pred_region
      %118 = dma.done [#allocation7], 8192
    $region45: #{tpu_custom_call.1} parent=1 // pred_fallthru
      _
    // Predicated region
    $region46: #{tpu_custom_call.1} parent=1 // pred_check
      _
    $region47: #{tpu_custom_call.1} parent=1 // pred_check_branch
      %120 = sbr.rel (0) target = $region49
    $region48: #{tpu_custom_call.1} parent=1 // pred_region
      %122 = dma.done [#allocation7], 2560
    $region49: #{tpu_custom_call.1} parent=1 // pred_fallthru
      _
    // Predicated region
    $region50: #{tpu_custom_call.1} parent=1 // pred_check
      _
    $region51: #{tpu_custom_call.1} parent=1 // pred_check_branch
      %124 = sbr.rel (0) target = $region53
    $region52: #{tpu_custom_call.1} parent=1 // pred_region
      %126 = dma.done [#allocation10], 512
    $region53: #{tpu_custom_call.1} parent=1 // pred_fallthru
      _
    // Predicated region
    $region54: #{tpu_custom_call.1} parent=1 // pred_check
      _
    $region55: #{tpu_custom_call.1} parent=1 // pred_check_branch
      %128 = sbr.rel (0) target = $region57
    $region56: #{tpu_custom_call.1} parent=1 // pred_region
      %130 = dma.done [#allocation10], 1024
    $region57: #{tpu_custom_call.1} parent=1 // pred_fallthru
      _
    // Predicated region
    $region58: #{tpu_custom_call.1} parent=1 // pred_check
      _
    $region59: #{tpu_custom_call.1} parent=1 // pred_check_branch
      %132 = sbr.rel (0) target = $region61
    $region60: #{tpu_custom_call.1} parent=1 // pred_region
      %134 = dma.done [#allocation13], 4096
    $region61: #{tpu_custom_call.1} parent=1 // pred_fallthru
      _
    // Predicated region
    $region62: #{tpu_custom_call.1} parent=1 // pred_check
      _
    $region63: #{tpu_custom_call.1} parent=1 // pred_check_branch
      %136 = sbr.rel (0) target = $region65
    $region64: #{tpu_custom_call.1} parent=1 // pred_region
      %138 = dma.done [#allocation5], 16
    $region65: #{tpu_custom_call.1} parent=1 // pred_fallthru
      _
    %139 = sfence
    %v140 = vld [vmem:[%s0] sm:$0xff]
    %v141 = vld [vmem:[%s0 + $0x8] sm:$0xff]
    %s142 = scalar_lea.vmem %s0, 16
    %v143 = vld [vmem:[%s142] sm:$0xff]
    %v144 = vld [vmem:[%s142 + $0x8] sm:$0xff]
    %s145 = scalar_lea.vmem %s0, 32
    %v146 = vld [vmem:[%s145] sm:$0xff]
    %v147 = vld [vmem:[%s145 + $0x8] sm:$0xff]
    %v148 = vld [vmem:[%s1] sm:$0xff]
    %v149 = vld [vmem:[%s1 + $0x8] sm:$0xff]
    %v150 = vld [vmem:[%s1 + $0x10] sm:$0xff]
    %v151 = vld [vmem:[%s1 + $0x18] sm:$0xff]
    %v152 = vld [vmem:[#allocation2] sm:$0xff]
    %v153 = vld [vmem:[#allocation2 + $0x8] sm:$0xff]
    %v154 = vld [vmem:[#allocation2 + $0x10] sm:$0xff]
    %v155 = vld [vmem:[#allocation2 + $0x18] sm:$0xff]
    %v156 = vld [vmem:[#allocation6] sm:$0xff]
    %v157 = vld [vmem:[#allocation6 + $0x8] sm:$0xff]
    %v158 = vld [vmem:[#allocation6 + $0x10] sm:$0xff]
    %v159 = vld [vmem:[#allocation6 + $0x18] sm:$0xff]
    %v160 = vld [vmem:[#allocation6 + $0x20] sm:$0xff]
    %v161 = vld [vmem:[#allocation6 + $0x28] sm:$0xff]
    %v162 = vld [vmem:[#allocation6 + $0x30] sm:$0xff]
    %v163 = vld [vmem:[#allocation6 + $0x38] sm:$0xff]
    %v164 = vld [vmem:[#allocation6 + $0x40] sm:$0xff]
    %v165 = vld [vmem:[#allocation6 + $0x48] sm:$0xff]
    %v166 = vld [vmem:[#allocation6 + $0x50] sm:$0xff]
    %v167 = vld [vmem:[#allocation6 + $0x58] sm:$0xff]
    %v168 = vld [vmem:[#allocation6 + $0x60] sm:$0xff]
    %v169 = vld [vmem:[#allocation6 + $0x68] sm:$0xff]
    %v170 = vld [vmem:[#allocation6 + $0x70] sm:$0xff]
    %v171 = vld [vmem:[#allocation6 + $0x78] sm:$0xff]
    %s172 = scalar_lea.vmem [#allocation6], 128
    %v173 = vld [vmem:[%s172] sm:$0xff]
    %v174 = vld [vmem:[%s172 + $0x8] sm:$0xff]
    %v175 = vld [vmem:[%s172 + $0x10] sm:$0xff]
    %v176 = vld [vmem:[%s172 + $0x18] sm:$0xff]
    %v177 = vld [vmem:[%s172 + $0x20] sm:$0xff]
    %v178 = vld [vmem:[%s172 + $0x28] sm:$0xff]
    %v179 = vld [vmem:[%s172 + $0x30] sm:$0xff]
    %v180 = vld [vmem:[%s172 + $0x38] sm:$0xff]
    %v181 = vld [vmem:[%s172 + $0x40] sm:$0xff]
    %v182 = vld [vmem:[%s172 + $0x48] sm:$0xff]
    %v183 = vld [vmem:[%s172 + $0x50] sm:$0xff]
    %v184 = vld [vmem:[%s172 + $0x58] sm:$0xff]
    %v185 = vld [vmem:[%s172 + $0x60] sm:$0xff]
    %v186 = vld [vmem:[%s172 + $0x68] sm:$0xff]
    %v187 = vld [vmem:[%s172 + $0x70] sm:$0xff]
    %v188 = vld [vmem:[%s172 + $0x78] sm:$0xff]
    %s189 = scalar_lea.vmem [#allocation6], 256
    %v190 = vld [vmem:[%s189] sm:$0xff]
    %v191 = vld [vmem:[%s189 + $0x8] sm:$0xff]
    %v192 = vld [vmem:[%s189 + $0x10] sm:$0xff]
    %v193 = vld [vmem:[%s189 + $0x18] sm:$0xff]
    %v194 = vld [vmem:[%s189 + $0x20] sm:$0xff]
    %v195 = vld [vmem:[%s189 + $0x28] sm:$0xff]
    %v196 = vld [vmem:[%s189 + $0x30] sm:$0xff]
    %v197 = vld [vmem:[%s189 + $0x38] sm:$0xff]
    %v198 = vld [vmem:[%s189 + $0x40] sm:$0xff]
    %v199 = vld [vmem:[%s189 + $0x48] sm:$0xff]
    %v200 = vld [vmem:[%s189 + $0x50] sm:$0xff]
    %v201 = vld [vmem:[%s189 + $0x58] sm:$0xff]
    %v202 = vld [vmem:[%s189 + $0x60] sm:$0xff]
    %v203 = vld [vmem:[%s189 + $0x68] sm:$0xff]
    %v204 = vld [vmem:[%s189 + $0x70] sm:$0xff]
    %v205 = vld [vmem:[%s189 + $0x78] sm:$0xff]
    %s206 = scalar_lea.vmem [#allocation6], 384
    %v207 = vld [vmem:[%s206] sm:$0xff]
    %v208 = vld [vmem:[%s206 + $0x8] sm:$0xff]
    %v209 = vld [vmem:[%s206 + $0x10] sm:$0xff]
    %v210 = vld [vmem:[%s206 + $0x18] sm:$0xff]
    %v211 = vld [vmem:[%s206 + $0x20] sm:$0xff]
    %v212 = vld [vmem:[%s206 + $0x28] sm:$0xff]
    %v213 = vld [vmem:[%s206 + $0x30] sm:$0xff]
    %v214 = vld [vmem:[%s206 + $0x38] sm:$0xff]
    %v215 = vld [vmem:[%s206 + $0x40] sm:$0xff]
    %v216 = vld [vmem:[%s206 + $0x48] sm:$0xff]
    %v217 = vld [vmem:[%s206 + $0x50] sm:$0xff]
    %v218 = vld [vmem:[%s206 + $0x58] sm:$0xff]
    %v219 = vld [vmem:[%s206 + $0x60] sm:$0xff]
    %v220 = vld [vmem:[%s206 + $0x68] sm:$0xff]
    %v221 = vld [vmem:[%s206 + $0x70] sm:$0xff]
    %v222 = vld [vmem:[%s206 + $0x78] sm:$0xff]
    %v223 = vld [vmem:[#allocation8] sm:$0xff]
    %v224 = vld [vmem:[#allocation8 + $0x8] sm:$0xff]
    %v225 = vld [vmem:[#allocation8 + $0x10] sm:$0xff]
    %v226 = vld [vmem:[#allocation8 + $0x18] sm:$0xff]
    %s227 = scalar_lea.vmem [#allocation8], 32
    %v228 = vld [vmem:[%s227] sm:$0xff]
    %v229 = vld [vmem:[%s227 + $0x8] sm:$0xff]
    %v230 = vld [vmem:[%s227 + $0x10] sm:$0xff]
    %v231 = vld [vmem:[%s227 + $0x18] sm:$0xff]
    %s232 = scalar_lea.vmem [#allocation8], 64
    %v233 = vld [vmem:[%s232] sm:$0xff]
    %v234 = vld [vmem:[%s232 + $0x8] sm:$0xff]
    %v235 = vld [vmem:[%s232 + $0x10] sm:$0xff]
    %v236 = vld [vmem:[%s232 + $0x18] sm:$0xff]
    %s237 = scalar_lea.vmem [#allocation8], 96
    %v238 = vld [vmem:[%s237] sm:$0xff]
    %v239 = vld [vmem:[%s237 + $0x8] sm:$0xff]
    %v240 = vld [vmem:[%s237 + $0x10] sm:$0xff]
    %v241 = vld [vmem:[%s237 + $0x18] sm:$0xff]
    %s242 = scalar_lea.vmem [#allocation8], 128
    %v243 = vld [vmem:[%s242] sm:$0xff]
    %v244 = vld [vmem:[%s242 + $0x8] sm:$0xff]
    %v245 = vld [vmem:[%s242 + $0x10] sm:$0xff]
    %v246 = vld [vmem:[%s242 + $0x18] sm:$0xff]
    %v247 = vld [vmem:[#allocation9] sm:$0xff]
    %v248 = vld [vmem:[#allocation9 + $0x8] sm:$0xff]
    %s249 = scalar_lea.vmem [#allocation9], 16
    %v250 = vld [vmem:[%s249] sm:$0xff]
    %v251 = vld [vmem:[%s249 + $0x8] sm:$0xff]
    %v252 = vld [vmem:[#allocation11] sm:$0xff]
    %v253 = vld [vmem:[#allocation11 + $0x8] sm:$0xff]
    %v254 = vld [vmem:[#allocation11 + $0x10] sm:$0xff]
    %v255 = vld [vmem:[#allocation11 + $0x18] sm:$0xff]
    %s256 = scalar_lea.vmem [#allocation11], 32
    %v257 = vld [vmem:[%s256] sm:$0xff]
    %v258 = vld [vmem:[%s256 + $0x8] sm:$0xff]
    %v259 = vld [vmem:[%s256 + $0x10] sm:$0xff]
    %v260 = vld [vmem:[%s256 + $0x18] sm:$0xff]
    %v261 = vld [vmem:[#allocation12] sm:$0xff]
    %v262 = vld [vmem:[#allocation12 + $0x8] sm:$0xff]
    %v263 = vld [vmem:[#allocation12 + $0x10] sm:$0xff]
    %v264 = vld [vmem:[#allocation12 + $0x18] sm:$0xff]
    %v265 = vld [vmem:[#allocation12 + $0x20] sm:$0xff]
    %v266 = vld [vmem:[#allocation12 + $0x28] sm:$0xff]
    %v267 = vld [vmem:[#allocation12 + $0x30] sm:$0xff]
    %v268 = vld [vmem:[#allocation12 + $0x38] sm:$0xff]
    %v269 = vld [vmem:[#allocation12 + $0x40] sm:$0xff]
    %v270 = vld [vmem:[#allocation12 + $0x48] sm:$0xff]
    %v271 = vld [vmem:[#allocation12 + $0x50] sm:$0xff]
    %v272 = vld [vmem:[#allocation12 + $0x58] sm:$0xff]
    %v273 = vld [vmem:[#allocation12 + $0x60] sm:$0xff]
    %v274 = vld [vmem:[#allocation12 + $0x68] sm:$0xff]
    %v275 = vld [vmem:[#allocation12 + $0x70] sm:$0xff]
    %v276 = vld [vmem:[#allocation12 + $0x78] sm:$0xff]
    %s277 = scalar_lea.vmem [#allocation12], 128
    %v278 = vld [vmem:[%s277] sm:$0xff]
    %v279 = vld [vmem:[%s277 + $0x8] sm:$0xff]
    %v280 = vld [vmem:[%s277 + $0x10] sm:$0xff]
    %v281 = vld [vmem:[%s277 + $0x18] sm:$0xff]
    %v282 = vld [vmem:[%s277 + $0x20] sm:$0xff]
    %v283 = vld [vmem:[%s277 + $0x28] sm:$0xff]
    %v284 = vld [vmem:[%s277 + $0x30] sm:$0xff]
    %v285 = vld [vmem:[%s277 + $0x38] sm:$0xff]
    %v286 = vld [vmem:[%s277 + $0x40] sm:$0xff]
    %v287 = vld [vmem:[%s277 + $0x48] sm:$0xff]
    %v288 = vld [vmem:[%s277 + $0x50] sm:$0xff]
    %v289 = vld [vmem:[%s277 + $0x58] sm:$0xff]
    %v290 = vld [vmem:[%s277 + $0x60] sm:$0xff]
    %v291 = vld [vmem:[%s277 + $0x68] sm:$0xff]
    %v292 = vld [vmem:[%s277 + $0x70] sm:$0xff]
    %v293 = vld [vmem:[%s277 + $0x78] sm:$0xff]
    %s294 = sld [smem:[#allocation14 + $0x2d]]
    %s295 = sld [smem:[#allocation14 + $0x2c]]
    %vm296 = vcmask 130048
    %v298 = vsel %vm296, %v148, 0
    %v301 = vsel %vm296, %v149, 0
    %v304 = vsel %vm296, %v150, 0
    %v307 = vsel %vm296, %v151, 0
    %309 = vmatpush.msra.mxu0 0.0
    %310 = vmatpush.msra.mxu0 0.0
    %311 = vmatpush.msra.mxu0 0.0
    %312 = vmatpush.msra.mxu0 0.0
    %313 = vmatpush.msra.mxu0 0.0
    %314 = vmatpush.msra.mxu0 0.0
    %315 = vmatpush.msra.mxu0 0.0
    %316 = vmatpush.msra.mxu0 0.0
    %317 = vmatpush.msra.mxu0 0.0
    %318 = vmatpush.msra.mxu0 0.0
    %319 = vmatpush.msra.mxu0 0.0
    %320 = vmatpush.msra.mxu0 0.0
    %321 = vmatpush.msra.mxu0 0.0
    %322 = vmatpush.msra.mxu0 0.0
    %323 = vmatpush.msra.mxu0 %v147
    %324 = vmatpush.msra.mxu0 %v146
    %325 = vmatmul.f32.gmra.mxu0 %v298
    %v326 = vpop.f32.mrf.mxu0
    %v327 = vadd.f32 0.0, %v326
    %328 = vmatmul.f32.gmra.mxu0 %v301
    %v329 = vpop.f32.mrf.mxu0
    %v330 = vadd.f32 0.0, %v329
    %331 = vmatmul.f32.gmra.mxu0 %v304
    %v332 = vpop.f32.mrf.mxu0
    %v333 = vadd.f32 0.0, %v332
    %334 = vmatmul.f32.gmra.mxu0 %v307
    %v335 = vpop.f32.mrf.mxu0
    %v336 = vadd.f32 0.0, %v335
    %337 = vdwg.mxu0
    %338 = vmatpush.msra.mxu0 %v171
    %339 = vmatpush.msra.mxu0 %v170
    %340 = vmatpush.msra.mxu0 %v169
    %341 = vmatpush.msra.mxu0 %v168
    %342 = vmatpush.msra.mxu0 %v167
    %343 = vmatpush.msra.mxu0 %v166
    %344 = vmatpush.msra.mxu0 %v165
    %345 = vmatpush.msra.mxu0 %v164
    %346 = vmatpush.msra.mxu0 %v163
    %347 = vmatpush.msra.mxu0 %v162
    %348 = vmatpush.msra.mxu0 %v161
    %349 = vmatpush.msra.mxu0 %v160
    %350 = vmatpush.msra.mxu0 %v159
    %351 = vmatpush.msra.mxu0 %v158
    %352 = vmatpush.msra.mxu0 %v157
    %353 = vmatpush.msra.mxu0 %v156
    %354 = vmatmul.f32.gmra.mxu0 %v327
    %v355 = vpop.f32.mrf.mxu0
    %v356 = vadd.f32 0.0, %v355
    %357 = vmatmul.f32.gmra.mxu0 %v330
    %v358 = vpop.f32.mrf.mxu0
    %v359 = vadd.f32 0.0, %v358
    %360 = vmatmul.f32.gmra.mxu0 %v333
    %v361 = vpop.f32.mrf.mxu0
    %v362 = vadd.f32 0.0, %v361
    %363 = vmatmul.f32.gmra.mxu0 %v336
    %v364 = vpop.f32.mrf.mxu0
    %v365 = vadd.f32 0.0, %v364
    %366 = vdwg.mxu0
    %367 = vmatpush.msra.mxu0 %v188
    %368 = vmatpush.msra.mxu0 %v187
    %369 = vmatpush.msra.mxu0 %v186
    %370 = vmatpush.msra.mxu0 %v185
    %371 = vmatpush.msra.mxu0 %v184
    %372 = vmatpush.msra.mxu0 %v183
    %373 = vmatpush.msra.mxu0 %v182
    %374 = vmatpush.msra.mxu0 %v181
    %375 = vmatpush.msra.mxu0 %v180
    %376 = vmatpush.msra.mxu0 %v179
    %377 = vmatpush.msra.mxu0 %v178
    %378 = vmatpush.msra.mxu0 %v177
    %379 = vmatpush.msra.mxu0 %v176
    %380 = vmatpush.msra.mxu0 %v175
    %381 = vmatpush.msra.mxu0 %v174
    %382 = vmatpush.msra.mxu0 %v173
    %383 = vmatmul.f32.gmra.mxu0 %v327
    %v384 = vpop.f32.mrf.mxu0
    %v385 = vadd.f32 0.0, %v384
    %386 = vmatmul.f32.gmra.mxu0 %v330
    %v387 = vpop.f32.mrf.mxu0
    %v388 = vadd.f32 0.0, %v387
    %389 = vmatmul.f32.gmra.mxu0 %v333
    %v390 = vpop.f32.mrf.mxu0
    %v391 = vadd.f32 0.0, %v390
    %392 = vmatmul.f32.gmra.mxu0 %v336
    %v393 = vpop.f32.mrf.mxu0
    %v394 = vadd.f32 0.0, %v393
    %395 = vdwg.mxu0
    %v396 = vsub.f32 %v356, %v391
    %v397 = vsub.f32 %v359, %v394
    %v398 = vadd.f32 %v385, %v362
    %v399 = vadd.f32 %v388, %v365
    %v400 = vmul.f32 %v396, %v223
    %v401 = vmul.f32 %v397, %v224
    %v402 = vmul.f32 %v398, %v225
    %v403 = vmul.f32 %v399, %v226
    %v404 = vmul.f32 %v398, %v228
    %v405 = vmul.f32 %v399, %v229
    %v406 = vmul.f32 %v396, %v230
    %v407 = vmul.f32 %v397, %v231
    %v408 = vadd.f32 %v400, %v404
    %v409 = vadd.f32 %v401, %v405
    %v410 = vadd.f32 %v402, %v406
    %v411 = vadd.f32 %v403, %v407
    %vm412 = vcmask 261120
    %v414 = vsel %vm412, %v152, 0
    %v417 = vsel %vm412, %v153, 0
    %v420 = vsel %vm412, %v154, 0
    %v423 = vsel %vm412, %v155, 0
    %425 = vmatpush.msra.mxu0 0.0
    %426 = vmatpush.msra.mxu0 0.0
    %427 = vmatpush.msra.mxu0 0.0
    %428 = vmatpush.msra.mxu0 0.0
    %429 = vmatpush.msra.mxu0 0.0
    %430 = vmatpush.msra.mxu0 0.0
    %431 = vmatpush.msra.mxu0 0.0
    %432 = vmatpush.msra.mxu0 0.0
    %433 = vmatpush.msra.mxu0 0.0
    %434 = vmatpush.msra.mxu0 0.0
    %435 = vmatpush.msra.mxu0 0.0
    %436 = vmatpush.msra.mxu0 0.0
    %437 = vmatpush.msra.mxu0 %v411
    %438 = vmatpush.msra.mxu0 %v410
    %439 = vmatpush.msra.mxu0 %v409
    %440 = vmatpush.msra.mxu0 %v408
    %441 = vmatmul.f32.gmra.mxu0 %v414
    %v442 = vpop.f32.mrf.mxu0
    %v443 = vadd.f32 0.0, %v442
    %444 = vmatmul.f32.gmra.mxu0 %v417
    %v445 = vpop.f32.mrf.mxu0
    %v446 = vadd.f32 0.0, %v445
    %447 = vmatmul.f32.gmra.mxu0 %v420
    %v448 = vpop.f32.mrf.mxu0
    %v449 = vadd.f32 0.0, %v448
    %450 = vmatmul.f32.gmra.mxu0 %v423
    %v451 = vpop.f32.mrf.mxu0
    %v452 = vadd.f32 0.0, %v451
    %453 = vdwg.mxu0
    %454 = vmatpush.msra.mxu0 %v205
    %455 = vmatpush.msra.mxu0 %v204
    %456 = vmatpush.msra.mxu0 %v203
    %457 = vmatpush.msra.mxu0 %v202
    %458 = vmatpush.msra.mxu0 %v201
    %459 = vmatpush.msra.mxu0 %v200
    %460 = vmatpush.msra.mxu0 %v199
    %461 = vmatpush.msra.mxu0 %v198
    %462 = vmatpush.msra.mxu0 %v197
    %463 = vmatpush.msra.mxu0 %v196
    %464 = vmatpush.msra.mxu0 %v195
    %465 = vmatpush.msra.mxu0 %v194
    %466 = vmatpush.msra.mxu0 %v193
    %467 = vmatpush.msra.mxu0 %v192
    %468 = vmatpush.msra.mxu0 %v191
    %469 = vmatpush.msra.mxu0 %v190
    %470 = vmatmul.f32.gmra.mxu0 %v443
    %v471 = vpop.f32.mrf.mxu0
    %v472 = vadd.f32 0.0, %v471
    %473 = vmatmul.f32.gmra.mxu0 %v446
    %v474 = vpop.f32.mrf.mxu0
    %v475 = vadd.f32 0.0, %v474
    %476 = vmatmul.f32.gmra.mxu0 %v449
    %v477 = vpop.f32.mrf.mxu0
    %v478 = vadd.f32 0.0, %v477
    %479 = vmatmul.f32.gmra.mxu0 %v452
    %v480 = vpop.f32.mrf.mxu0
    %v481 = vadd.f32 0.0, %v480
    %482 = vdwg.mxu0
    %483 = vmatpush.msra.mxu0 %v222
    %484 = vmatpush.msra.mxu0 %v221
    %485 = vmatpush.msra.mxu0 %v220
    %486 = vmatpush.msra.mxu0 %v219
    %487 = vmatpush.msra.mxu0 %v218
    %488 = vmatpush.msra.mxu0 %v217
    %489 = vmatpush.msra.mxu0 %v216
    %490 = vmatpush.msra.mxu0 %v215
    %491 = vmatpush.msra.mxu0 %v214
    %492 = vmatpush.msra.mxu0 %v213
    %493 = vmatpush.msra.mxu0 %v212
    %494 = vmatpush.msra.mxu0 %v211
    %495 = vmatpush.msra.mxu0 %v210
    %496 = vmatpush.msra.mxu0 %v209
    %497 = vmatpush.msra.mxu0 %v208
    %498 = vmatpush.msra.mxu0 %v207
    %499 = vmatmul.f32.gmra.mxu0 %v443
    %v500 = vpop.f32.mrf.mxu0
    %v501 = vadd.f32 0.0, %v500
    %502 = vmatmul.f32.gmra.mxu0 %v446
    %v503 = vpop.f32.mrf.mxu0
    %v504 = vadd.f32 0.0, %v503
    %505 = vmatmul.f32.gmra.mxu0 %v449
    %v506 = vpop.f32.mrf.mxu0
    %v507 = vadd.f32 0.0, %v506
    %508 = vmatmul.f32.gmra.mxu0 %v452
    %v509 = vpop.f32.mrf.mxu0
    %v510 = vadd.f32 0.0, %v509
    %511 = vdwg.mxu0
    %v512 = vsub.f32 %v472, %v507
    %v513 = vsub.f32 %v475, %v510
    %v514 = vadd.f32 %v501, %v478
    %v515 = vadd.f32 %v504, %v481
    %v516 = vmul.f32 %v512, %v512
    %v517 = vmul.f32 %v513, %v513
    %v518 = vmul.f32 %v514, %v514
    %v519 = vmul.f32 %v515, %v515
    %v520 = vadd.f32 %v516, %v518
    %v521 = vadd.f32 %v517, %v519
    %v522 = vrsqrt.pop %v520
    %v523 = vmul.f32 %v522, %v520
    %v524 = vmul.f32 %v523, %v522
    %v525 = vmul.f32 0.5, %v524
    %v526 = vsub.f32 1.5, %v525
    %v527 = vmul.f32 %v522, %v526
    %v528 = vmul.f32 %v520, %v527
    %vm529 = vcmp.eq.f32.partialorder %v520, inf
    %v530 = vsel %vm529, %v520, %v528
    %vm531 = vcmp.eq.f32.partialorder %v520, 0.0
    %v532 = vand.u32 %v520, 2147483648
    %v533 = vsel %vm531, %v532, %v530
    %v534 = vrsqrt.pop %v521
    %v535 = vmul.f32 %v534, %v521
    %v536 = vmul.f32 %v535, %v534
    %v537 = vmul.f32 0.5, %v536
    %v538 = vsub.f32 1.5, %v537
    %v539 = vmul.f32 %v534, %v538
    %v540 = vmul.f32 %v521, %v539
    %vm541 = vcmp.eq.f32.partialorder %v521, inf
    %v542 = vsel %vm541, %v521, %v540
    %vm543 = vcmp.eq.f32.partialorder %v521, 0.0
    %v544 = vand.u32 %v521, 2147483648
    %v545 = vsel %vm543, %v544, %v542
    %v546 = vmin.f32 %v533, %v545
    %547 = vmin.xlane.f32.xlu0 %v546
    %v548 = vpop.xlane.xlu0 %547
    %v549 = vrot.slane %v548, 4
    %v550 = vmin.f32 %v548, %v549
    %v551 = vrot.slane %v550, 2
    %v552 = vmin.f32 %v550, %v551
    %v553 = vrot.slane %v552, 1
    %v554 = vmin.f32 %v552, %v553
    %s555 = vtos %v554
    %v556 = vmax.f32 %v533, %v545
    %557 = vmax.xlane.f32.xlu0 %v556
    %v558 = vpop.xlane.xlu0 %557
    %v559 = vrot.slane %v558, 4
    %v560 = vmax.f32 %v558, %v559
    %v561 = vrot.slane %v560, 2
    %v562 = vmax.f32 %v560, %v561
    %v563 = vrot.slane %v562, 1
    %v564 = vmax.f32 %v562, %v563
    %s565 = vtos %v564
    %s566 = ssub.f32 %s565, %s555
    %v567 = vstv %s566
    %v568 = vrcp.pop %v567
    %v569 = vstv %s555
    %v570 = vsub.f32 %v533, %v569
    %v571 = vsub.f32 %v545, %v569
    %v572 = vmul.f32 %v570, %v568
    %v573 = vmul.f32 %v571, %v568
    %v574 = vsub.f32 %v140, %v143
    %v575 = vsub.f32 %v141, %v144
    %v576 = vstv %s294
    %v577 = vmul.f32 %v576, %v574
    %v578 = vmul.f32 %v576, %v575
    %v579 = vadd.f32 %v572, %v577
    %v580 = vadd.f32 %v573, %v578
    %581 = vmatpush.msra.mxu0 0.0
    %582 = vmatpush.msra.mxu0 0.0
    %583 = vmatpush.msra.mxu0 0.0
    %584 = vmatpush.msra.mxu0 0.0
    %585 = vmatpush.msra.mxu0 0.0
    %586 = vmatpush.msra.mxu0 0.0
    %587 = vmatpush.msra.mxu0 0.0
    %588 = vmatpush.msra.mxu0 0.0
    %589 = vmatpush.msra.mxu0 0.0
    %590 = vmatpush.msra.mxu0 0.0
    %591 = vmatpush.msra.mxu0 0.0
    %592 = vmatpush.msra.mxu0 0.0
    %593 = vmatpush.msra.mxu0 0.0
    %594 = vmatpush.msra.mxu0 0.0
    %595 = vmatpush.msra.mxu0 %v580
    %596 = vmatpush.msra.mxu0 %v579
    %597 = vmatmul.f32.gmra.mxu0 %v298
    %v598 = vpop.f32.mrf.mxu0
    %v599 = vadd.f32 0.0, %v598
    %600 = vmatmul.f32.gmra.mxu0 %v301
    %v601 = vpop.f32.mrf.mxu0
    %v602 = vadd.f32 0.0, %v601
    %603 = vmatmul.f32.gmra.mxu0 %v304
    %v604 = vpop.f32.mrf.mxu0
    %v605 = vadd.f32 0.0, %v604
    %606 = vmatmul.f32.gmra.mxu0 %v307
    %v607 = vpop.f32.mrf.mxu0
    %v608 = vadd.f32 0.0, %v607
    %609 = vdwg.mxu0
    %610 = vmatpush.msra.mxu0 %v171
    %611 = vmatpush.msra.mxu0 %v170
    %612 = vmatpush.msra.mxu0 %v169
    %613 = vmatpush.msra.mxu0 %v168
    %614 = vmatpush.msra.mxu0 %v167
    %615 = vmatpush.msra.mxu0 %v166
    %616 = vmatpush.msra.mxu0 %v165
    %617 = vmatpush.msra.mxu0 %v164
    %618 = vmatpush.msra.mxu0 %v163
    %619 = vmatpush.msra.mxu0 %v162
    %620 = vmatpush.msra.mxu0 %v161
    %621 = vmatpush.msra.mxu0 %v160
    %622 = vmatpush.msra.mxu0 %v159
    %623 = vmatpush.msra.mxu0 %v158
    %624 = vmatpush.msra.mxu0 %v157
    %625 = vmatpush.msra.mxu0 %v156
    %626 = vmatmul.f32.gmra.mxu0 %v599
    %v627 = vpop.f32.mrf.mxu0
    %v628 = vadd.f32 0.0, %v627
    %629 = vmatmul.f32.gmra.mxu0 %v602
    %v630 = vpop.f32.mrf.mxu0
    %v631 = vadd.f32 0.0, %v630
    %632 = vmatmul.f32.gmra.mxu0 %v605
    %v633 = vpop.f32.mrf.mxu0
    %v634 = vadd.f32 0.0, %v633
    %635 = vmatmul.f32.gmra.mxu0 %v608
    %v636 = vpop.f32.mrf.mxu0
    %v637 = vadd.f32 0.0, %v636
    %638 = vdwg.mxu0
    %639 = vmatpush.msra.mxu0 %v188
    %640 = vmatpush.msra.mxu0 %v187
    %641 = vmatpush.msra.mxu0 %v186
    %642 = vmatpush.msra.mxu0 %v185
    %643 = vmatpush.msra.mxu0 %v184
    %644 = vmatpush.msra.mxu0 %v183
    %645 = vmatpush.msra.mxu0 %v182
    %646 = vmatpush.msra.mxu0 %v181
    %647 = vmatpush.msra.mxu0 %v180
    %648 = vmatpush.msra.mxu0 %v179
    %649 = vmatpush.msra.mxu0 %v178
    %650 = vmatpush.msra.mxu0 %v177
    %651 = vmatpush.msra.mxu0 %v176
    %652 = vmatpush.msra.mxu0 %v175
    %653 = vmatpush.msra.mxu0 %v174
    %654 = vmatpush.msra.mxu0 %v173
    %655 = vmatmul.f32.gmra.mxu0 %v599
    %v656 = vpop.f32.mrf.mxu0
    %v657 = vadd.f32 0.0, %v656
    %658 = vmatmul.f32.gmra.mxu0 %v602
    %v659 = vpop.f32.mrf.mxu0
    %v660 = vadd.f32 0.0, %v659
    %661 = vmatmul.f32.gmra.mxu0 %v605
    %v662 = vpop.f32.mrf.mxu0
    %v663 = vadd.f32 0.0, %v662
    %664 = vmatmul.f32.gmra.mxu0 %v608
    %v665 = vpop.f32.mrf.mxu0
    %v666 = vadd.f32 0.0, %v665
    %667 = vdwg.mxu0
    %v668 = vsub.f32 %v628, %v663
    %v669 = vsub.f32 %v631, %v666
    %v670 = vadd.f32 %v657, %v634
    %v671 = vadd.f32 %v660, %v637
    %v672 = vmul.f32 %v668, %v233
    %v673 = vmul.f32 %v669, %v234
    %v674 = vmul.f32 %v670, %v235
    %v675 = vmul.f32 %v671, %v236
    %v676 = vmul.f32 %v670, %v238
    %v677 = vmul.f32 %v671, %v239
    %v678 = vmul.f32 %v668, %v240
    %v679 = vmul.f32 %v669, %v241
    %v680 = vadd.f32 %v672, %v676
    %v681 = vadd.f32 %v673, %v677
    %v682 = vadd.f32 %v674, %v678
    %v683 = vadd.f32 %v675, %v679
    %v684 = vmul.f32 %v680, %v243
    %v685 = vmul.f32 %v681, %v244
    %v686 = vmul.f32 %v682, %v245
    %v687 = vmul.f32 %v683, %v246
    %688 = vmatpush.msra.mxu0 0.0
    %689 = vmatpush.msra.mxu0 0.0
    %690 = vmatpush.msra.mxu0 0.0
    %691 = vmatpush.msra.mxu0 0.0
    %692 = vmatpush.msra.mxu0 0.0
    %693 = vmatpush.msra.mxu0 0.0
    %694 = vmatpush.msra.mxu0 0.0
    %695 = vmatpush.msra.mxu0 0.0
    %696 = vmatpush.msra.mxu0 0.0
    %697 = vmatpush.msra.mxu0 0.0
    %698 = vmatpush.msra.mxu0 0.0
    %699 = vmatpush.msra.mxu0 0.0
    %700 = vmatpush.msra.mxu0 %v687
    %701 = vmatpush.msra.mxu0 %v686
    %702 = vmatpush.msra.mxu0 %v685
    %703 = vmatpush.msra.mxu0 %v684
    %704 = vmatmul.f32.gmra.mxu0 %v414
    %v705 = vpop.f32.mrf.mxu0
    %v706 = vadd.f32 0.0, %v705
    %707 = vmatmul.f32.gmra.mxu0 %v417
    %v708 = vpop.f32.mrf.mxu0
    %v709 = vadd.f32 0.0, %v708
    %710 = vmatmul.f32.gmra.mxu0 %v420
    %v711 = vpop.f32.mrf.mxu0
    %v712 = vadd.f32 0.0, %v711
    %713 = vmatmul.f32.gmra.mxu0 %v423
    %v714 = vpop.f32.mrf.mxu0
    %v715 = vadd.f32 0.0, %v714
    %716 = vdwg.mxu0
    %717 = vmatpush.msra.mxu0 %v205
    %718 = vmatpush.msra.mxu0 %v204
    %719 = vmatpush.msra.mxu0 %v203
    %720 = vmatpush.msra.mxu0 %v202
    %721 = vmatpush.msra.mxu0 %v201
    %722 = vmatpush.msra.mxu0 %v200
    %723 = vmatpush.msra.mxu0 %v199
    %724 = vmatpush.msra.mxu0 %v198
    %725 = vmatpush.msra.mxu0 %v197
    %726 = vmatpush.msra.mxu0 %v196
    %727 = vmatpush.msra.mxu0 %v195
    %728 = vmatpush.msra.mxu0 %v194
    %729 = vmatpush.msra.mxu0 %v193
    %730 = vmatpush.msra.mxu0 %v192
    %731 = vmatpush.msra.mxu0 %v191
    %732 = vmatpush.msra.mxu0 %v190
    %733 = vmatmul.f32.gmra.mxu0 %v706
    %v734 = vpop.f32.mrf.mxu0
    %v735 = vadd.f32 0.0, %v734
    %736 = vmatmul.f32.gmra.mxu0 %v709
    %v737 = vpop.f32.mrf.mxu0
    %v738 = vadd.f32 0.0, %v737
    %739 = vmatmul.f32.gmra.mxu0 %v712
    %v740 = vpop.f32.mrf.mxu0
    %v741 = vadd.f32 0.0, %v740
    %742 = vmatmul.f32.gmra.mxu0 %v715
    %v743 = vpop.f32.mrf.mxu0
    %v744 = vadd.f32 0.0, %v743
    %745 = vdwg.mxu0
    %746 = vmatpush.msra.mxu0 %v222
    %747 = vmatpush.msra.mxu0 %v221
    %748 = vmatpush.msra.mxu0 %v220
    %749 = vmatpush.msra.mxu0 %v219
    %750 = vmatpush.msra.mxu0 %v218
    %751 = vmatpush.msra.mxu0 %v217
    %752 = vmatpush.msra.mxu0 %v216
    %753 = vmatpush.msra.mxu0 %v215
    %754 = vmatpush.msra.mxu0 %v214
    %755 = vmatpush.msra.mxu0 %v213
    %756 = vmatpush.msra.mxu0 %v212
    %757 = vmatpush.msra.mxu0 %v211
    %758 = vmatpush.msra.mxu0 %v210
    %759 = vmatpush.msra.mxu0 %v209
    %760 = vmatpush.msra.mxu0 %v208
    %761 = vmatpush.msra.mxu0 %v207
    %762 = vmatmul.f32.gmra.mxu0 %v706
    %v763 = vpop.f32.mrf.mxu0
    %v764 = vadd.f32 0.0, %v763
    %765 = vmatmul.f32.gmra.mxu0 %v709
    %v766 = vpop.f32.mrf.mxu0
    %v767 = vadd.f32 0.0, %v766
    %768 = vmatmul.f32.gmra.mxu0 %v712
    %v769 = vpop.f32.mrf.mxu0
    %v770 = vadd.f32 0.0, %v769
    %771 = vmatmul.f32.gmra.mxu0 %v715
    %v772 = vpop.f32.mrf.mxu0
    %v773 = vadd.f32 0.0, %v772
    %774 = vdwg.mxu0
    %v775 = vsub.f32 %v735, %v770
    %v776 = vsub.f32 %v738, %v773
    %v777 = vadd.f32 %v764, %v741
    %v778 = vadd.f32 %v767, %v744
    %v779 = vmul.f32 %v775, %v775
    %v780 = vmul.f32 %v776, %v776
    %v781 = vmul.f32 %v777, %v777
    %v782 = vmul.f32 %v778, %v778
    %v783 = vadd.f32 %v779, %v781
    %v784 = vadd.f32 %v780, %v782
    %v785 = vrsqrt.pop %v783
    %v786 = vmul.f32 %v785, %v783
    %v787 = vmul.f32 %v786, %v785
    %v788 = vmul.f32 0.5, %v787
    %v789 = vsub.f32 1.5, %v788
    %v790 = vmul.f32 %v785, %v789
    %v791 = vmul.f32 %v783, %v790
    %vm792 = vcmp.eq.f32.partialorder %v783, inf
    %v793 = vsel %vm792, %v783, %v791
    %vm794 = vcmp.eq.f32.partialorder %v783, 0.0
    %v795 = vand.u32 %v783, 2147483648
    %v796 = vsel %vm794, %v795, %v793
    %v797 = vrsqrt.pop %v784
    %v798 = vmul.f32 %v797, %v784
    %v799 = vmul.f32 %v798, %v797
    %v800 = vmul.f32 0.5, %v799
    %v801 = vsub.f32 1.5, %v800
    %v802 = vmul.f32 %v797, %v801
    %v803 = vmul.f32 %v784, %v802
    %vm804 = vcmp.eq.f32.partialorder %v784, inf
    %v805 = vsel %vm804, %v784, %v803
    %vm806 = vcmp.eq.f32.partialorder %v784, 0.0
    %v807 = vand.u32 %v784, 2147483648
    %v808 = vsel %vm806, %v807, %v805
    %v809 = vadd.f32 %v796, %v143
    %v810 = vadd.f32 %v808, %v144
    %v811 = vmin.f32 %v809, %v810
    %812 = vmin.xlane.f32.xlu0 %v811
    %v813 = vpop.xlane.xlu0 %812
    %v814 = vrot.slane %v813, 4
    %v815 = vmin.f32 %v813, %v814
    %v816 = vrot.slane %v815, 2
    %v817 = vmin.f32 %v815, %v816
    %v818 = vrot.slane %v817, 1
    %v819 = vmin.f32 %v817, %v818
    %s820 = vtos %v819
    %v821 = vmax.f32 %v809, %v810
    %822 = vmax.xlane.f32.xlu0 %v821
    %v823 = vpop.xlane.xlu0 %822
    %v824 = vrot.slane %v823, 4
    %v825 = vmax.f32 %v823, %v824
    %v826 = vrot.slane %v825, 2
    %v827 = vmax.f32 %v825, %v826
    %v828 = vrot.slane %v827, 1
    %v829 = vmax.f32 %v827, %v828
    %s830 = vtos %v829
    %s831 = ssub.f32 %s830, %s820
    %v832 = vstv %s831
    %v833 = vrcp.pop %v832
    %v834 = vstv %s820
    %v835 = vsub.f32 %v809, %v834
    %v836 = vsub.f32 %v810, %v834
    %v837 = vmul.f32 %v835, %v833
    %v838 = vmul.f32 %v836, %v833
    %s839 = sld [smem:[#allocation14]]
    %s840 = sld [smem:[#allocation14 + $0x1]]
    %s841 = sld [smem:[#allocation14 + $0x2]]
    %s842 = sld [smem:[#allocation14 + $0x3]]
    %s843 = sld [smem:[#allocation14 + $0x4]]
    %s844 = sld [smem:[#allocation14 + $0x5]]
    %s845 = sld [smem:[#allocation14 + $0x6]]
    %s846 = sld [smem:[#allocation14 + $0x7]]
    %s847 = sld [smem:[#allocation14 + $0x8]]
    %v849 = vsel %vm296, %v247, 0
    %v852 = vsel %vm296, %v248, 0
    %854 = vmatpush.msra.mxu0 0.0
    %855 = vmatpush.msra.mxu0 0.0
    %856 = vmatpush.msra.mxu0 0.0
    %857 = vmatpush.msra.mxu0 0.0
    %858 = vmatpush.msra.mxu0 0.0
    %859 = vmatpush.msra.mxu0 0.0
    %860 = vmatpush.msra.mxu0 0.0
    %861 = vmatpush.msra.mxu0 0.0
    %862 = vmatpush.msra.mxu0 0.0
    %863 = vmatpush.msra.mxu0 0.0
    %864 = vmatpush.msra.mxu0 0.0
    %865 = vmatpush.msra.mxu0 0.0
    %866 = vmatpush.msra.mxu0 0.0
    %867 = vmatpush.msra.mxu0 0.0
    %868 = vmatpush.msra.mxu0 %v838
    %869 = vmatpush.msra.mxu0 %v837
    %870 = vmatmul.f32.gmra.mxu0 %v849
    %v871 = vpop.f32.mrf.mxu0
    %v872 = vadd.f32 0.0, %v871
    %873 = vmatmul.f32.gmra.mxu0 %v852
    %v874 = vpop.f32.mrf.mxu0
    %v875 = vadd.f32 0.0, %v874
    %876 = vdwg.mxu0
    %v878 = vsel %vm296, %v250, 0
    %v881 = vsel %vm296, %v251, 0
    %883 = vmatpush.msra.mxu0 0.0
    %884 = vmatpush.msra.mxu0 0.0
    %885 = vmatpush.msra.mxu0 0.0
    %886 = vmatpush.msra.mxu0 0.0
    %887 = vmatpush.msra.mxu0 0.0
    %888 = vmatpush.msra.mxu0 0.0
    %889 = vmatpush.msra.mxu0 0.0
    %890 = vmatpush.msra.mxu0 0.0
    %891 = vmatpush.msra.mxu0 0.0
    %892 = vmatpush.msra.mxu0 0.0
    %893 = vmatpush.msra.mxu0 0.0
    %894 = vmatpush.msra.mxu0 0.0
    %895 = vmatpush.msra.mxu0 0.0
    %896 = vmatpush.msra.mxu0 0.0
    %897 = vmatpush.msra.mxu0 %v838
    %898 = vmatpush.msra.mxu0 %v837
    %899 = vmatmul.f32.gmra.mxu0 %v878
    %v900 = vpop.f32.mrf.mxu0
    %v901 = vadd.f32 0.0, %v900
    %902 = vmatmul.f32.gmra.mxu0 %v881
    %v903 = vpop.f32.mrf.mxu0
    %v904 = vadd.f32 0.0, %v903
    %905 = vdwg.mxu0
    %v906 = vstv %s839
    %v907 = vmul.f32 %v906, %v872
    %v908 = vmul.f32 %v906, %v875
    %v909 = vstv %s842
    %v910 = vmul.f32 %v909, %v837
    %v911 = vmul.f32 %v909, %v838
    %v912 = vadd.f32 %v907, %v910
    %v913 = vadd.f32 %v908, %v911
    %v914 = vstv %s845
    %v915 = vmul.f32 %v914, %v901
    %v916 = vmul.f32 %v914, %v904
    %v917 = vadd.f32 %v912, %v915
    %v918 = vadd.f32 %v913, %v916
    %v919 = vstv %s840
    %v920 = vmul.f32 %v919, %v872
    %v921 = vmul.f32 %v919, %v875
    %v922 = vstv %s843
    %v923 = vmul.f32 %v922, %v837
    %v924 = vmul.f32 %v922, %v838
    %v925 = vadd.f32 %v920, %v923
    %v926 = vadd.f32 %v921, %v924
    %v927 = vstv %s846
    %v928 = vmul.f32 %v927, %v901
    %v929 = vmul.f32 %v927, %v904
    %v930 = vadd.f32 %v925, %v928
    %v931 = vadd.f32 %v926, %v929
    %v932 = vstv %s841
    %v933 = vmul.f32 %v932, %v872
    %v934 = vmul.f32 %v932, %v875
    %v935 = vstv %s844
    %v936 = vmul.f32 %v935, %v837
    %v937 = vmul.f32 %v935, %v838
    %v938 = vadd.f32 %v933, %v936
    %v939 = vadd.f32 %v934, %v937
    %v940 = vstv %s847
    %v941 = vmul.f32 %v940, %v901
    %v942 = vmul.f32 %v940, %v904
    %v943 = vadd.f32 %v938, %v941
    %v944 = vadd.f32 %v939, %v942
    %945 = vmatpush.msra.mxu0 %v276
    %946 = vmatpush.msra.mxu0 %v275
    %947 = vmatpush.msra.mxu0 %v274
    %948 = vmatpush.msra.mxu0 %v273
    %949 = vmatpush.msra.mxu0 %v272
    %950 = vmatpush.msra.mxu0 %v271
    %951 = vmatpush.msra.mxu0 %v270
    %952 = vmatpush.msra.mxu0 %v269
    %953 = vmatpush.msra.mxu0 %v268
    %954 = vmatpush.msra.mxu0 %v267
    %955 = vmatpush.msra.mxu0 %v266
    %956 = vmatpush.msra.mxu0 %v265
    %957 = vmatpush.msra.mxu0 %v264
    %958 = vmatpush.msra.mxu0 %v263
    %959 = vmatpush.msra.mxu0 %v262
    %960 = vmatpush.msra.mxu0 %v261
    %961 = vmatmul.f32.gmra.mxu0 %v917
    %v962 = vpop.f32.mrf.mxu0
    %v963 = vadd.f32 %v930, %v962
    %964 = vmatmul.f32.gmra.mxu0 %v918
    %v965 = vpop.f32.mrf.mxu0
    %v966 = vadd.f32 %v931, %v965
    %967 = vdwg.mxu0
    %968 = vmatpush.msra.mxu0 %v293
    %969 = vmatpush.msra.mxu0 %v292
    %970 = vmatpush.msra.mxu0 %v291
    %971 = vmatpush.msra.mxu0 %v290
    %972 = vmatpush.msra.mxu0 %v289
    %973 = vmatpush.msra.mxu0 %v288
    %974 = vmatpush.msra.mxu0 %v287
    %975 = vmatpush.msra.mxu0 %v286
    %976 = vmatpush.msra.mxu0 %v285
    %977 = vmatpush.msra.mxu0 %v284
    %978 = vmatpush.msra.mxu0 %v283
    %979 = vmatpush.msra.mxu0 %v282
    %980 = vmatpush.msra.mxu0 %v281
    %981 = vmatpush.msra.mxu0 %v280
    %982 = vmatpush.msra.mxu0 %v279
    %983 = vmatpush.msra.mxu0 %v278
    %984 = vmatmul.f32.gmra.mxu0 %v943
    %v985 = vpop.f32.mrf.mxu0
    %v986 = vadd.f32 0.0, %v985
    %987 = vmatmul.f32.gmra.mxu0 %v944
    %v988 = vpop.f32.mrf.mxu0
    %v989 = vadd.f32 0.0, %v988
    %990 = vdwg.mxu0
    %v991 = vadd.f32 %v963, %v986
    %v992 = vadd.f32 %v966, %v989
    %s993 = sld [smem:[#allocation14 + $0x24]]
    %v994 = vstv %s993
    %v995 = vmul.f32 %v991, %v994
    %v996 = vmul.f32 %v992, %v994
    %s997 = sld [smem:[#allocation14 + $0x25]]
    %v998 = vstv %s997
    %v999 = vadd.f32 %v995, %v998
    %v1000 = vadd.f32 %v996, %v998
    %vm1001 = vcmp.gt.f32.partialorder %v999, 0.0
    %vm1002 = vcmp.gt.f32.partialorder %v1000, 0.0
    %v1003 = vmul.f32 %v999, 0.01
    %v1004 = vmul.f32 %v1000, 0.01
    %v1005 = vsel %vm1001, %v999, %v1003
    %v1006 = vsel %vm1002, %v1000, %v1004
    %s1007 = sld [smem:[#allocation14 + $0x9]]
    %s1008 = sld [smem:[#allocation14 + $0xa]]
    %s1009 = sld [smem:[#allocation14 + $0xb]]
    %s1010 = sld [smem:[#allocation14 + $0xc]]
    %s1011 = sld [smem:[#allocation14 + $0xd]]
    %s1012 = sld [smem:[#allocation14 + $0xe]]
    %s1013 = sld [smem:[#allocation14 + $0xf]]
    %s1014 = sld [smem:[#allocation14 + $0x10]]
    %s1015 = sld [smem:[#allocation14 + $0x11]]
    %1016 = vmatpush.msra.mxu0 0.0
    %1017 = vmatpush.msra.mxu0 0.0
    %1018 = vmatpush.msra.mxu0 0.0
    %1019 = vmatpush.msra.mxu0 0.0
    %1020 = vmatpush.msra.mxu0 0.0
    %1021 = vmatpush.msra.mxu0 0.0
    %1022 = vmatpush.msra.mxu0 0.0
    %1023 = vmatpush.msra.mxu0 0.0
    %1024 = vmatpush.msra.mxu0 0.0
    %1025 = vmatpush.msra.mxu0 0.0
    %1026 = vmatpush.msra.mxu0 0.0
    %1027 = vmatpush.msra.mxu0 0.0
    %1028 = vmatpush.msra.mxu0 0.0
    %1029 = vmatpush.msra.mxu0 0.0
    %1030 = vmatpush.msra.mxu0 %v1006
    %1031 = vmatpush.msra.mxu0 %v1005
    %1032 = vmatmul.f32.gmra.mxu0 %v849
    %v1033 = vpop.f32.mrf.mxu0
    %v1034 = vadd.f32 0.0, %v1033
    %1035 = vmatmul.f32.gmra.mxu0 %v852
    %v1036 = vpop.f32.mrf.mxu0
    %v1037 = vadd.f32 0.0, %v1036
    %1038 = vdwg.mxu0
    %1039 = vmatpush.msra.mxu0 0.0
    %1040 = vmatpush.msra.mxu0 0.0
    %1041 = vmatpush.msra.mxu0 0.0
    %1042 = vmatpush.msra.mxu0 0.0
    %1043 = vmatpush.msra.mxu0 0.0
    %1044 = vmatpush.msra.mxu0 0.0
    %1045 = vmatpush.msra.mxu0 0.0
    %1046 = vmatpush.msra.mxu0 0.0
    %1047 = vmatpush.msra.mxu0 0.0
    %1048 = vmatpush.msra.mxu0 0.0
    %1049 = vmatpush.msra.mxu0 0.0
    %1050 = vmatpush.msra.mxu0 0.0
    %1051 = vmatpush.msra.mxu0 0.0
    %1052 = vmatpush.msra.mxu0 0.0
    %1053 = vmatpush.msra.mxu0 %v1006
    %1054 = vmatpush.msra.mxu0 %v1005
    %1055 = vmatmul.f32.gmra.mxu0 %v878
    %v1056 = vpop.f32.mrf.mxu0
    %v1057 = vadd.f32 0.0, %v1056
    %1058 = vmatmul.f32.gmra.mxu0 %v881
    %v1059 = vpop.f32.mrf.mxu0
    %v1060 = vadd.f32 0.0, %v1059
    %1061 = vdwg.mxu0
    %v1062 = vstv %s1007
    %v1063 = vmul.f32 %v1062, %v1034
    %v1064 = vmul.f32 %v1062, %v1037
    %v1065 = vstv %s1010
    %v1066 = vmul.f32 %v1065, %v1005
    %v1067 = vmul.f32 %v1065, %v1006
    %v1068 = vadd.f32 %v1063, %v1066
    %v1069 = vadd.f32 %v1064, %v1067
    %v1070 = vstv %s1013
    %v1071 = vmul.f32 %v1070, %v1057
    %v1072 = vmul.f32 %v1070, %v1060
    %v1073 = vadd.f32 %v1068, %v1071
    %v1074 = vadd.f32 %v1069, %v1072
    %v1075 = vstv %s1008
    %v1076 = vmul.f32 %v1075, %v1034
    %v1077 = vmul.f32 %v1075, %v1037
    %v1078 = vstv %s1011
    %v1079 = vmul.f32 %v1078, %v1005
    %v1080 = vmul.f32 %v1078, %v1006
    %v1081 = vadd.f32 %v1076, %v1079
    %v1082 = vadd.f32 %v1077, %v1080
    %v1083 = vstv %s1014
    %v1084 = vmul.f32 %v1083, %v1057
    %v1085 = vmul.f32 %v1083, %v1060
    %v1086 = vadd.f32 %v1081, %v1084
    %v1087 = vadd.f32 %v1082, %v1085
    %v1088 = vstv %s1009
    %v1089 = vmul.f32 %v1088, %v1034
    %v1090 = vmul.f32 %v1088, %v1037
    %v1091 = vstv %s1012
    %v1092 = vmul.f32 %v1091, %v1005
    %v1093 = vmul.f32 %v1091, %v1006
    %v1094 = vadd.f32 %v1089, %v1092
    %v1095 = vadd.f32 %v1090, %v1093
    %v1096 = vstv %s1015
    %v1097 = vmul.f32 %v1096, %v1057
    %v1098 = vmul.f32 %v1096, %v1060
    %v1099 = vadd.f32 %v1094, %v1097
    %v1100 = vadd.f32 %v1095, %v1098
    %1101 = vmatpush.msra.mxu0 %v276
    %1102 = vmatpush.msra.mxu0 %v275
    %1103 = vmatpush.msra.mxu0 %v274
    %1104 = vmatpush.msra.mxu0 %v273
    %1105 = vmatpush.msra.mxu0 %v272
    %1106 = vmatpush.msra.mxu0 %v271
    %1107 = vmatpush.msra.mxu0 %v270
    %1108 = vmatpush.msra.mxu0 %v269
    %1109 = vmatpush.msra.mxu0 %v268
    %1110 = vmatpush.msra.mxu0 %v267
    %1111 = vmatpush.msra.mxu0 %v266
    %1112 = vmatpush.msra.mxu0 %v265
    %1113 = vmatpush.msra.mxu0 %v264
    %1114 = vmatpush.msra.mxu0 %v263
    %1115 = vmatpush.msra.mxu0 %v262
    %1116 = vmatpush.msra.mxu0 %v261
    %1117 = vmatmul.f32.gmra.mxu0 %v1073
    %v1118 = vpop.f32.mrf.mxu0
    %v1119 = vadd.f32 %v1086, %v1118
    %1120 = vmatmul.f32.gmra.mxu0 %v1074
    %v1121 = vpop.f32.mrf.mxu0
    %v1122 = vadd.f32 %v1087, %v1121
    %1123 = vdwg.mxu0
    %1124 = vmatpush.msra.mxu0 %v293
    %1125 = vmatpush.msra.mxu0 %v292
    %1126 = vmatpush.msra.mxu0 %v291
    %1127 = vmatpush.msra.mxu0 %v290
    %1128 = vmatpush.msra.mxu0 %v289
    %1129 = vmatpush.msra.mxu0 %v288
    %1130 = vmatpush.msra.mxu0 %v287
    %1131 = vmatpush.msra.mxu0 %v286
    %1132 = vmatpush.msra.mxu0 %v285
    %1133 = vmatpush.msra.mxu0 %v284
    %1134 = vmatpush.msra.mxu0 %v283
    %1135 = vmatpush.msra.mxu0 %v282
    %1136 = vmatpush.msra.mxu0 %v281
    %1137 = vmatpush.msra.mxu0 %v280
    %1138 = vmatpush.msra.mxu0 %v279
    %1139 = vmatpush.msra.mxu0 %v278
    %1140 = vmatmul.f32.gmra.mxu0 %v1099
    %v1141 = vpop.f32.mrf.mxu0
    %v1142 = vadd.f32 0.0, %v1141
    %1143 = vmatmul.f32.gmra.mxu0 %v1100
    %v1144 = vpop.f32.mrf.mxu0
    %v1145 = vadd.f32 0.0, %v1144
    %1146 = vdwg.mxu0
    %v1147 = vadd.f32 %v1119, %v1142
    %v1148 = vadd.f32 %v1122, %v1145
    %s1149 = sld [smem:[#allocation14 + $0x26]]
    %v1150 = vstv %s1149
    %v1151 = vmul.f32 %v1147, %v1150
    %v1152 = vmul.f32 %v1148, %v1150
    %s1153 = sld [smem:[#allocation14 + $0x27]]
    %v1154 = vstv %s1153
    %v1155 = vadd.f32 %v1151, %v1154
    %v1156 = vadd.f32 %v1152, %v1154
    %v1157 = vadd.f32 %v837, %v1155
    %v1158 = vadd.f32 %v838, %v1156
    %vm1159 = vcmp.gt.f32.partialorder %v1157, 0.0
    %vm1160 = vcmp.gt.f32.partialorder %v1158, 0.0
    %v1161 = vmul.f32 %v1157, 0.01
    %v1162 = vmul.f32 %v1158, 0.01
    %v1163 = vsel %vm1159, %v1157, %v1161
    %v1164 = vsel %vm1160, %v1158, %v1162
    %vm1165 = vcmp.gt.f32.partialorder %v1163, 0.0
    %vm1166 = vcmp.gt.f32.partialorder %v1164, 0.0
    %vm1167 = vcmp.lt.f32.partialorder %v1163, 0.0
    %vm1168 = vcmp.lt.f32.partialorder %v1164, 0.0
    %v1169 = vsel %vm1167, -1.0, 0.0
    %v1170 = vsel %vm1168, -1.0, 0.0
    %v1171 = vsel %vm1165, 1.0, %v1169
    %v1172 = vsel %vm1166, 1.0, %v1170
    %v1173 = vand.u32 2147483647, %v1163
    %v1174 = vand.u32 2147483647, %v1164
    %v1175 = vstv %s295
    %v1176 = vsub.f32 %v1173, %v1175
    %v1177 = vsub.f32 %v1174, %v1175
    %v1178 = vmax.f32 %v1176, 0.0
    %v1179 = vmax.f32 %v1177, 0.0
    %v1180 = vmul.f32 %v1171, %v1178
    %v1181 = vmul.f32 %v1172, %v1179
    %s1182 = sld [smem:[#allocation14 + $0x12]]
    %s1183 = sld [smem:[#allocation14 + $0x13]]
    %s1184 = sld [smem:[#allocation14 + $0x14]]
    %s1185 = sld [smem:[#allocation14 + $0x15]]
    %s1186 = sld [smem:[#allocation14 + $0x16]]
    %s1187 = sld [smem:[#allocation14 + $0x17]]
    %s1188 = sld [smem:[#allocation14 + $0x18]]
    %s1189 = sld [smem:[#allocation14 + $0x19]]
    %s1190 = sld [smem:[#allocation14 + $0x1a]]
    %v1192 = vsel %vm412, %v252, 0
    %v1195 = vsel %vm412, %v253, 0
    %v1198 = vsel %vm412, %v254, 0
    %v1201 = vsel %vm412, %v255, 0
    %1203 = vmatpush.msra.mxu0 0.0
    %1204 = vmatpush.msra.mxu0 0.0
    %1205 = vmatpush.msra.mxu0 0.0
    %1206 = vmatpush.msra.mxu0 0.0
    %1207 = vmatpush.msra.mxu0 0.0
    %1208 = vmatpush.msra.mxu0 0.0
    %1209 = vmatpush.msra.mxu0 0.0
    %1210 = vmatpush.msra.mxu0 0.0
    %1211 = vmatpush.msra.mxu0 0.0
    %1212 = vmatpush.msra.mxu0 0.0
    %1213 = vmatpush.msra.mxu0 0.0
    %1214 = vmatpush.msra.mxu0 0.0
    %1215 = vmatpush.msra.mxu0 %v1164
    %1216 = vmatpush.msra.mxu0 %v1163
    %1217 = vmatpush.msra.mxu0 %v1181
    %1218 = vmatpush.msra.mxu0 %v1180
    %1219 = vmatmul.f32.gmra.mxu0 %v1192
    %v1220 = vpop.f32.mrf.mxu0
    %v1221 = vadd.f32 0.0, %v1220
    %1222 = vmatmul.f32.gmra.mxu0 %v1195
    %v1223 = vpop.f32.mrf.mxu0
    %v1224 = vadd.f32 0.0, %v1223
    %1225 = vmatmul.f32.gmra.mxu0 %v1198
    %v1226 = vpop.f32.mrf.mxu0
    %v1227 = vadd.f32 0.0, %v1226
    %1228 = vmatmul.f32.gmra.mxu0 %v1201
    %v1229 = vpop.f32.mrf.mxu0
    %v1230 = vadd.f32 0.0, %v1229
    %1231 = vdwg.mxu0
    %v1233 = vsel %vm412, %v257, 0
    %v1236 = vsel %vm412, %v258, 0
    %v1239 = vsel %vm412, %v259, 0
    %v1242 = vsel %vm412, %v260, 0
    %1244 = vmatpush.msra.mxu0 0.0
    %1245 = vmatpush.msra.mxu0 0.0
    %1246 = vmatpush.msra.mxu0 0.0
    %1247 = vmatpush.msra.mxu0 0.0
    %1248 = vmatpush.msra.mxu0 0.0
    %1249 = vmatpush.msra.mxu0 0.0
    %1250 = vmatpush.msra.mxu0 0.0
    %1251 = vmatpush.msra.mxu0 0.0
    %1252 = vmatpush.msra.mxu0 0.0
    %1253 = vmatpush.msra.mxu0 0.0
    %1254 = vmatpush.msra.mxu0 0.0
    %1255 = vmatpush.msra.mxu0 0.0
    %1256 = vmatpush.msra.mxu0 %v1164
    %1257 = vmatpush.msra.mxu0 %v1163
    %1258 = vmatpush.msra.mxu0 %v1181
    %1259 = vmatpush.msra.mxu0 %v1180
    %1260 = vmatmul.f32.gmra.mxu0 %v1233
    %v1261 = vpop.f32.mrf.mxu0
    %v1262 = vadd.f32 0.0, %v1261
    %1263 = vmatmul.f32.gmra.mxu0 %v1236
    %v1264 = vpop.f32.mrf.mxu0
    %v1265 = vadd.f32 0.0, %v1264
    %1266 = vmatmul.f32.gmra.mxu0 %v1239
    %v1267 = vpop.f32.mrf.mxu0
    %v1268 = vadd.f32 0.0, %v1267
    %1269 = vmatmul.f32.gmra.mxu0 %v1242
    %v1270 = vpop.f32.mrf.mxu0
    %v1271 = vadd.f32 0.0, %v1270
    %1272 = vdwg.mxu0
    %v1273 = vstv %s1182
    %v1274 = vmul.f32 %v1273, %v1221
    %v1275 = vmul.f32 %v1273, %v1224
    %v1276 = vmul.f32 %v1273, %v1227
    %v1277 = vmul.f32 %v1273, %v1230
    %v1278 = vstv %s1185
    %v1279 = vmul.f32 %v1278, %v1180
    %v1280 = vmul.f32 %v1278, %v1181
    %v1281 = vmul.f32 %v1278, %v1163
    %v1282 = vmul.f32 %v1278, %v1164
    %v1283 = vadd.f32 %v1274, %v1279
    %v1284 = vadd.f32 %v1275, %v1280
    %v1285 = vadd.f32 %v1276, %v1281
    %v1286 = vadd.f32 %v1277, %v1282
    %v1287 = vstv %s1188
    %v1288 = vmul.f32 %v1287, %v1262
    %v1289 = vmul.f32 %v1287, %v1265
    %v1290 = vmul.f32 %v1287, %v1268
    %v1291 = vmul.f32 %v1287, %v1271
    %v1292 = vadd.f32 %v1283, %v1288
    %v1293 = vadd.f32 %v1284, %v1289
    %v1294 = vadd.f32 %v1285, %v1290
    %v1295 = vadd.f32 %v1286, %v1291
    %v1296 = vstv %s1183
    %v1297 = vmul.f32 %v1296, %v1221
    %v1298 = vmul.f32 %v1296, %v1224
    %v1299 = vmul.f32 %v1296, %v1227
    %v1300 = vmul.f32 %v1296, %v1230
    %v1301 = vstv %s1186
    %v1302 = vmul.f32 %v1301, %v1180
    %v1303 = vmul.f32 %v1301, %v1181
    %v1304 = vmul.f32 %v1301, %v1163
    %v1305 = vmul.f32 %v1301, %v1164
    %v1306 = vadd.f32 %v1297, %v1302
    %v1307 = vadd.f32 %v1298, %v1303
    %v1308 = vadd.f32 %v1299, %v1304
    %v1309 = vadd.f32 %v1300, %v1305
    %v1310 = vstv %s1189
    %v1311 = vmul.f32 %v1310, %v1262
    %v1312 = vmul.f32 %v1310, %v1265
    %v1313 = vmul.f32 %v1310, %v1268
    %v1314 = vmul.f32 %v1310, %v1271
    %v1315 = vadd.f32 %v1306, %v1311
    %v1316 = vadd.f32 %v1307, %v1312
    %v1317 = vadd.f32 %v1308, %v1313
    %v1318 = vadd.f32 %v1309, %v1314
    %v1319 = vstv %s1184
    %v1320 = vmul.f32 %v1319, %v1221
    %v1321 = vmul.f32 %v1319, %v1224
    %v1322 = vmul.f32 %v1319, %v1227
    %v1323 = vmul.f32 %v1319, %v1230
    %v1324 = vstv %s1187
    %v1325 = vmul.f32 %v1324, %v1180
    %v1326 = vmul.f32 %v1324, %v1181
    %v1327 = vmul.f32 %v1324, %v1163
    %v1328 = vmul.f32 %v1324, %v1164
    %v1329 = vadd.f32 %v1320, %v1325
    %v1330 = vadd.f32 %v1321, %v1326
    %v1331 = vadd.f32 %v1322, %v1327
    %v1332 = vadd.f32 %v1323, %v1328
    %v1333 = vstv %s1190
    %v1334 = vmul.f32 %v1333, %v1262
    %v1335 = vmul.f32 %v1333, %v1265
    %v1336 = vmul.f32 %v1333, %v1268
    %v1337 = vmul.f32 %v1333, %v1271
    %v1338 = vadd.f32 %v1329, %v1334
    %v1339 = vadd.f32 %v1330, %v1335
    %v1340 = vadd.f32 %v1331, %v1336
    %v1341 = vadd.f32 %v1332, %v1337
    %1342 = vmatpush.msra.mxu0 %v276
    %1343 = vmatpush.msra.mxu0 %v275
    %1344 = vmatpush.msra.mxu0 %v274
    %1345 = vmatpush.msra.mxu0 %v273
    %1346 = vmatpush.msra.mxu0 %v272
    %1347 = vmatpush.msra.mxu0 %v271
    %1348 = vmatpush.msra.mxu0 %v270
    %1349 = vmatpush.msra.mxu0 %v269
    %1350 = vmatpush.msra.mxu0 %v268
    %1351 = vmatpush.msra.mxu0 %v267
    %1352 = vmatpush.msra.mxu0 %v266
    %1353 = vmatpush.msra.mxu0 %v265
    %1354 = vmatpush.msra.mxu0 %v264
    %1355 = vmatpush.msra.mxu0 %v263
    %1356 = vmatpush.msra.mxu0 %v262
    %1357 = vmatpush.msra.mxu0 %v261
    %1358 = vmatmul.f32.gmra.mxu0 %v1292
    %v1359 = vpop.f32.mrf.mxu0
    %v1360 = vadd.f32 %v1315, %v1359
    %1361 = vmatmul.f32.gmra.mxu0 %v1293
    %v1362 = vpop.f32.mrf.mxu0
    %v1363 = vadd.f32 %v1316, %v1362
    %1364 = vmatmul.f32.gmra.mxu0 %v1294
    %v1365 = vpop.f32.mrf.mxu0
    %v1366 = vadd.f32 %v1317, %v1365
    %1367 = vmatmul.f32.gmra.mxu0 %v1295
    %v1368 = vpop.f32.mrf.mxu0
    %v1369 = vadd.f32 %v1318, %v1368
    %1370 = vdwg.mxu0
    %1371 = vmatpush.msra.mxu0 %v293
    %1372 = vmatpush.msra.mxu0 %v292
    %1373 = vmatpush.msra.mxu0 %v291
    %1374 = vmatpush.msra.mxu0 %v290
    %1375 = vmatpush.msra.mxu0 %v289
    %1376 = vmatpush.msra.mxu0 %v288
    %1377 = vmatpush.msra.mxu0 %v287
    %1378 = vmatpush.msra.mxu0 %v286
    %1379 = vmatpush.msra.mxu0 %v285
    %1380 = vmatpush.msra.mxu0 %v284
    %1381 = vmatpush.msra.mxu0 %v283
    %1382 = vmatpush.msra.mxu0 %v282
    %1383 = vmatpush.msra.mxu0 %v281
    %1384 = vmatpush.msra.mxu0 %v280
    %1385 = vmatpush.msra.mxu0 %v279
    %1386 = vmatpush.msra.mxu0 %v278
    %1387 = vmatmul.f32.gmra.mxu0 %v1338
    %v1388 = vpop.f32.mrf.mxu0
    %v1389 = vadd.f32 0.0, %v1388
    %1390 = vmatmul.f32.gmra.mxu0 %v1339
    %v1391 = vpop.f32.mrf.mxu0
    %v1392 = vadd.f32 0.0, %v1391
    %1393 = vmatmul.f32.gmra.mxu0 %v1340
    %v1394 = vpop.f32.mrf.mxu0
    %v1395 = vadd.f32 0.0, %v1394
    %1396 = vmatmul.f32.gmra.mxu0 %v1341
    %v1397 = vpop.f32.mrf.mxu0
    %v1398 = vadd.f32 0.0, %v1397
    %1399 = vdwg.mxu0
    %v1400 = vadd.f32 %v1360, %v1389
    %v1401 = vadd.f32 %v1363, %v1392
    %v1402 = vadd.f32 %v1366, %v1395
    %v1403 = vadd.f32 %v1369, %v1398
    %s1404 = sld [smem:[#allocation14 + $0x28]]
    %v1405 = vstv %s1404
    %v1406 = vmul.f32 %v1400, %v1405
    %v1407 = vmul.f32 %v1401, %v1405
    %v1408 = vmul.f32 %v1402, %v1405
    %v1409 = vmul.f32 %v1403, %v1405
    %s1410 = sld [smem:[#allocation14 + $0x29]]
    %v1411 = vstv %s1410
    %v1412 = vadd.f32 %v1406, %v1411
    %v1413 = vadd.f32 %v1407, %v1411
    %v1414 = vadd.f32 %v1408, %v1411
    %v1415 = vadd.f32 %v1409, %v1411
    %vm1416 = vcmp.gt.f32.partialorder %v1412, 0.0
    %vm1417 = vcmp.gt.f32.partialorder %v1413, 0.0
    %vm1418 = vcmp.gt.f32.partialorder %v1414, 0.0
    %vm1419 = vcmp.gt.f32.partialorder %v1415, 0.0
    %v1420 = vmul.f32 %v1412, 0.01
    %v1421 = vmul.f32 %v1413, 0.01
    %v1422 = vmul.f32 %v1414, 0.01
    %v1423 = vmul.f32 %v1415, 0.01
    %v1424 = vsel %vm1416, %v1412, %v1420
    %v1425 = vsel %vm1417, %v1413, %v1421
    %v1426 = vsel %vm1418, %v1414, %v1422
    %v1427 = vsel %vm1419, %v1415, %v1423
    %s1428 = sld [smem:[#allocation14 + $0x1b]]
    %s1429 = sld [smem:[#allocation14 + $0x1c]]
    %s1430 = sld [smem:[#allocation14 + $0x1d]]
    %s1431 = sld [smem:[#allocation14 + $0x1e]]
    %s1432 = sld [smem:[#allocation14 + $0x1f]]
    %s1433 = sld [smem:[#allocation14 + $0x20]]
    %s1434 = sld [smem:[#allocation14 + $0x21]]
    %s1435 = sld [smem:[#allocation14 + $0x22]]
    %s1436 = sld [smem:[#allocation14 + $0x23]]
    %1437 = vmatpush.msra.mxu0 0.0
    %1438 = vmatpush.msra.mxu0 0.0
    %1439 = vmatpush.msra.mxu0 0.0
    %1440 = vmatpush.msra.mxu0 0.0
    %1441 = vmatpush.msra.mxu0 0.0
    %1442 = vmatpush.msra.mxu0 0.0
    %1443 = vmatpush.msra.mxu0 0.0
    %1444 = vmatpush.msra.mxu0 0.0
    %1445 = vmatpush.msra.mxu0 0.0
    %1446 = vmatpush.msra.mxu0 0.0
    %1447 = vmatpush.msra.mxu0 0.0
    %1448 = vmatpush.msra.mxu0 0.0
    %1449 = vmatpush.msra.mxu0 %v1427
    %1450 = vmatpush.msra.mxu0 %v1426
    %1451 = vmatpush.msra.mxu0 %v1425
    %1452 = vmatpush.msra.mxu0 %v1424
    %1453 = vmatmul.f32.gmra.mxu0 %v1192
    %v1454 = vpop.f32.mrf.mxu0
    %v1455 = vadd.f32 0.0, %v1454
    %1456 = vmatmul.f32.gmra.mxu0 %v1195
    %v1457 = vpop.f32.mrf.mxu0
    %v1458 = vadd.f32 0.0, %v1457
    %1459 = vmatmul.f32.gmra.mxu0 %v1198
    %v1460 = vpop.f32.mrf.mxu0
    %v1461 = vadd.f32 0.0, %v1460
    %1462 = vmatmul.f32.gmra.mxu0 %v1201
    %v1463 = vpop.f32.mrf.mxu0
    %v1464 = vadd.f32 0.0, %v1463
    %1465 = vdwg.mxu0
    %1466 = vmatpush.msra.mxu0 0.0
    %1467 = vmatpush.msra.mxu0 0.0
    %1468 = vmatpush.msra.mxu0 0.0
    %1469 = vmatpush.msra.mxu0 0.0
    %1470 = vmatpush.msra.mxu0 0.0
    %1471 = vmatpush.msra.mxu0 0.0
    %1472 = vmatpush.msra.mxu0 0.0
    %1473 = vmatpush.msra.mxu0 0.0
    %1474 = vmatpush.msra.mxu0 0.0
    %1475 = vmatpush.msra.mxu0 0.0
    %1476 = vmatpush.msra.mxu0 0.0
    %1477 = vmatpush.msra.mxu0 0.0
    %1478 = vmatpush.msra.mxu0 %v1427
    %1479 = vmatpush.msra.mxu0 %v1426
    %1480 = vmatpush.msra.mxu0 %v1425
    %1481 = vmatpush.msra.mxu0 %v1424
    %1482 = vmatmul.f32.gmra.mxu0 %v1233
    %v1483 = vpop.f32.mrf.mxu0
    %v1484 = vadd.f32 0.0, %v1483
    %1485 = vmatmul.f32.gmra.mxu0 %v1236
    %v1486 = vpop.f32.mrf.mxu0
    %v1487 = vadd.f32 0.0, %v1486
    %1488 = vmatmul.f32.gmra.mxu0 %v1239
    %v1489 = vpop.f32.mrf.mxu0
    %v1490 = vadd.f32 0.0, %v1489
    %1491 = vmatmul.f32.gmra.mxu0 %v1242
    %v1492 = vpop.f32.mrf.mxu0
    %v1493 = vadd.f32 0.0, %v1492
    %1494 = vdwg.mxu0
    %v1495 = vstv %s1428
    %v1496 = vmul.f32 %v1495, %v1455
    %v1497 = vmul.f32 %v1495, %v1458
    %v1498 = vmul.f32 %v1495, %v1461
    %v1499 = vmul.f32 %v1495, %v1464
    %v1500 = vstv %s1431
    %v1501 = vmul.f32 %v1500, %v1424
    %v1502 = vmul.f32 %v1500, %v1425
    %v1503 = vmul.f32 %v1500, %v1426
    %v1504 = vmul.f32 %v1500, %v1427
    %v1505 = vadd.f32 %v1496, %v1501
    %v1506 = vadd.f32 %v1497, %v1502
    %v1507 = vadd.f32 %v1498, %v1503
    %v1508 = vadd.f32 %v1499, %v1504
    %v1509 = vstv %s1434
    %v1510 = vmul.f32 %v1509, %v1484
    %v1511 = vmul.f32 %v1509, %v1487
    %v1512 = vmul.f32 %v1509, %v1490
    %v1513 = vmul.f32 %v1509, %v1493
    %v1514 = vadd.f32 %v1505, %v1510
    %v1515 = vadd.f32 %v1506, %v1511
    %v1516 = vadd.f32 %v1507, %v1512
    %v1517 = vadd.f32 %v1508, %v1513
    %v1518 = vstv %s1429
    %v1519 = vmul.f32 %v1518, %v1455
    %v1520 = vmul.f32 %v1518, %v1458
    %v1521 = vmul.f32 %v1518, %v1461
    %v1522 = vmul.f32 %v1518, %v1464
    %v1523 = vstv %s1432
    %v1524 = vmul.f32 %v1523, %v1424
    %v1525 = vmul.f32 %v1523, %v1425
    %v1526 = vmul.f32 %v1523, %v1426
    %v1527 = vmul.f32 %v1523, %v1427
    %v1528 = vadd.f32 %v1519, %v1524
    %v1529 = vadd.f32 %v1520, %v1525
    %v1530 = vadd.f32 %v1521, %v1526
    %v1531 = vadd.f32 %v1522, %v1527
    %v1532 = vstv %s1435
    %v1533 = vmul.f32 %v1532, %v1484
    %v1534 = vmul.f32 %v1532, %v1487
    %v1535 = vmul.f32 %v1532, %v1490
    %v1536 = vmul.f32 %v1532, %v1493
    %v1537 = vadd.f32 %v1528, %v1533
    %v1538 = vadd.f32 %v1529, %v1534
    %v1539 = vadd.f32 %v1530, %v1535
    %v1540 = vadd.f32 %v1531, %v1536
    %v1541 = vstv %s1430
    %v1542 = vmul.f32 %v1541, %v1455
    %v1543 = vmul.f32 %v1541, %v1458
    %v1544 = vmul.f32 %v1541, %v1461
    %v1545 = vmul.f32 %v1541, %v1464
    %v1546 = vstv %s1433
    %v1547 = vmul.f32 %v1546, %v1424
    %v1548 = vmul.f32 %v1546, %v1425
    %v1549 = vmul.f32 %v1546, %v1426
    %v1550 = vmul.f32 %v1546, %v1427
    %v1551 = vadd.f32 %v1542, %v1547
    %v1552 = vadd.f32 %v1543, %v1548
    %v1553 = vadd.f32 %v1544, %v1549
    %v1554 = vadd.f32 %v1545, %v1550
    %v1555 = vstv %s1436
    %v1556 = vmul.f32 %v1555, %v1484
    %v1557 = vmul.f32 %v1555, %v1487
    %v1558 = vmul.f32 %v1555, %v1490
    %v1559 = vmul.f32 %v1555, %v1493
    %v1560 = vadd.f32 %v1551, %v1556
    %v1561 = vadd.f32 %v1552, %v1557
    %v1562 = vadd.f32 %v1553, %v1558
    %v1563 = vadd.f32 %v1554, %v1559
    %1564 = vmatpush.msra.mxu0 %v276
    %1565 = vmatpush.msra.mxu0 %v275
    %1566 = vmatpush.msra.mxu0 %v274
    %1567 = vmatpush.msra.mxu0 %v273
    %1568 = vmatpush.msra.mxu0 %v272
    %1569 = vmatpush.msra.mxu0 %v271
    %1570 = vmatpush.msra.mxu0 %v270
    %1571 = vmatpush.msra.mxu0 %v269
    %1572 = vmatpush.msra.mxu0 %v268
    %1573 = vmatpush.msra.mxu0 %v267
    %1574 = vmatpush.msra.mxu0 %v266
    %1575 = vmatpush.msra.mxu0 %v265
    %1576 = vmatpush.msra.mxu0 %v264
    %1577 = vmatpush.msra.mxu0 %v263
    %1578 = vmatpush.msra.mxu0 %v262
    %1579 = vmatpush.msra.mxu0 %v261
    %1580 = vmatmul.f32.gmra.mxu0 %v1514
    %v1581 = vpop.f32.mrf.mxu0
    %v1582 = vadd.f32 %v1537, %v1581
    %1583 = vmatmul.f32.gmra.mxu0 %v1515
    %v1584 = vpop.f32.mrf.mxu0
    %v1585 = vadd.f32 %v1538, %v1584
    %1586 = vmatmul.f32.gmra.mxu0 %v1516
    %v1587 = vpop.f32.mrf.mxu0
    %v1588 = vadd.f32 %v1539, %v1587
    %1589 = vmatmul.f32.gmra.mxu0 %v1517
    %v1590 = vpop.f32.mrf.mxu0
    %v1591 = vadd.f32 %v1540, %v1590
    %1592 = vdwg.mxu0
    %1593 = vmatpush.msra.mxu0 %v293
    %1594 = vmatpush.msra.mxu0 %v292
    %1595 = vmatpush.msra.mxu0 %v291
    %1596 = vmatpush.msra.mxu0 %v290
    %1597 = vmatpush.msra.mxu0 %v289
    %1598 = vmatpush.msra.mxu0 %v288
    %1599 = vmatpush.msra.mxu0 %v287
    %1600 = vmatpush.msra.mxu0 %v286
    %1601 = vmatpush.msra.mxu0 %v285
    %1602 = vmatpush.msra.mxu0 %v284
    %1603 = vmatpush.msra.mxu0 %v283
    %1604 = vmatpush.msra.mxu0 %v282
    %1605 = vmatpush.msra.mxu0 %v281
    %1606 = vmatpush.msra.mxu0 %v280
    %1607 = vmatpush.msra.mxu0 %v279
    %1608 = vmatpush.msra.mxu0 %v278
    %1609 = vmatmul.f32.gmra.mxu0 %v1560
    %v1610 = vpop.f32.mrf.mxu0
    %v1611 = vadd.f32 0.0, %v1610
    %1612 = vmatmul.f32.gmra.mxu0 %v1561
    %v1613 = vpop.f32.mrf.mxu0
    %v1614 = vadd.f32 0.0, %v1613
    %1615 = vmatmul.f32.gmra.mxu0 %v1562
    %v1616 = vpop.f32.mrf.mxu0
    %v1617 = vadd.f32 0.0, %v1616
    %1618 = vmatmul.f32.gmra.mxu0 %v1563
    %v1619 = vpop.f32.mrf.mxu0
    %v1620 = vadd.f32 0.0, %v1619
    %1621 = vdwg.mxu0
    %v1622 = vadd.f32 %v1582, %v1611
    %v1623 = vadd.f32 %v1585, %v1614
    %v1624 = vadd.f32 %v1588, %v1617
    %v1625 = vadd.f32 %v1591, %v1620
    %s1626 = sld [smem:[#allocation14 + $0x2a]]
    %v1627 = vstv %s1626
    %v1628 = vmul.f32 %v1622, %v1627
    %v1629 = vmul.f32 %v1623, %v1627
    %v1630 = vmul.f32 %v1624, %v1627
    %v1631 = vmul.f32 %v1625, %v1627
    %s1632 = sld [smem:[#allocation14 + $0x2b]]
    %v1633 = vstv %s1632
    %v1634 = vadd.f32 %v1628, %v1633
    %v1635 = vadd.f32 %v1629, %v1633
    %v1636 = vadd.f32 %v1630, %v1633
    %v1637 = vadd.f32 %v1631, %v1633
    %v1638 = vadd.f32 %v1180, %v1634
    %v1639 = vadd.f32 %v1181, %v1635
    %v1640 = vadd.f32 %v1163, %v1636
    %v1641 = vadd.f32 %v1164, %v1637
    %vm1642 = vcmp.gt.f32.partialorder %v1638, 0.0
    %vm1643 = vcmp.gt.f32.partialorder %v1639, 0.0
    %vm1644 = vcmp.gt.f32.partialorder %v1640, 0.0
    %vm1645 = vcmp.gt.f32.partialorder %v1641, 0.0
    %v1646 = vmul.f32 %v1638, 0.01
    %v1647 = vmul.f32 %v1639, 0.01
    %v1648 = vmul.f32 %v1640, 0.01
    %v1649 = vmul.f32 %v1641, 0.01
    %v1650 = vsel %vm1642, %v1638, %v1646
    %v1651 = vsel %vm1643, %v1639, %v1647
    %v1652 = vsel %vm1644, %v1640, %v1648
    %v1653 = vsel %vm1645, %v1641, %v1649
    %v1654 = vsub.f32 %v1652, %v837
    %v1655 = vsub.f32 %v1653, %v838
    %v1656 = vmin.f32 %v1650, %v1651
    %1657 = vmin.xlane.f32.xlu0 %v1656
    %v1658 = vpop.xlane.xlu0 %1657
    %v1659 = vrot.slane %v1658, 4
    %v1660 = vmin.f32 %v1658, %v1659
    %v1661 = vrot.slane %v1660, 2
    %v1662 = vmin.f32 %v1660, %v1661
    %v1663 = vrot.slane %v1662, 1
    %v1664 = vmin.f32 %v1662, %v1663
    %s1665 = vtos %v1664
    %v1666 = vmax.f32 %v1650, %v1651
    %1667 = vmax.xlane.f32.xlu0 %v1666
    %v1668 = vpop.xlane.xlu0 %1667
    %v1669 = vrot.slane %v1668, 4
    %v1670 = vmax.f32 %v1668, %v1669
    %v1671 = vrot.slane %v1670, 2
    %v1672 = vmax.f32 %v1670, %v1671
    %v1673 = vrot.slane %v1672, 1
    %v1674 = vmax.f32 %v1672, %v1673
    %s1675 = vtos %v1674
    %s1676 = ssub.f32 %s1675, %s1665
    %v1677 = vstv %s1676
    %v1678 = vrcp.pop %v1677
    %v1679 = vstv %s1665
    %v1680 = vsub.f32 %v1650, %v1679
    %v1681 = vsub.f32 %v1651, %v1679
    %v1682 = vmul.f32 %v1680, %v1678
    %v1683 = vmul.f32 %v1681, %v1678
    %v1684 = vmul.f32 %v832, %v1682
    %v1685 = vmul.f32 %v832, %v1683
    %v1686 = vadd.f32 %v834, %v1684
    %v1687 = vadd.f32 %v834, %v1685
    %v1688 = vsub.f32 %v796, %v1686
    %v1689 = vsub.f32 %v808, %v1687
    %v1690 = vadd.f32 %v143, %v1688
    %v1691 = vadd.f32 %v144, %v1689
    %1692 = vst [vmem:[#allocation15] sm:$0xff] %v796
    %1693 = vst [vmem:[#allocation15 + $0x20] sm:$0xff] %v808
    %1694 = vst [vmem:[#allocation15 + $0x8] sm:$0xff] %v1686
    %1695 = vst [vmem:[#allocation15 + $0x28] sm:$0xff] %v1687
    %1696 = vst [vmem:[#allocation15 + $0x10] sm:$0xff] %v1690
    %1697 = vst [vmem:[#allocation15 + $0x30] sm:$0xff] %v1691
    %1698 = vst [vmem:[#allocation15 + $0x18] sm:$0xff] %v1654
    %1699 = vst [vmem:[#allocation15 + $0x38] sm:$0xff] %v1655
    // Predicated region
    $region66: #{tpu_custom_call.1} parent=1 // pred_check
      _
    $region67: #{tpu_custom_call.1} parent=1 // pred_check_branch
      %1701 = sbr.rel (0) target = $region69
    $region68: #{tpu_custom_call.1} parent=1 // pred_region
      %1703 = vsyncadd [#allocation4], 0
      %s1704 = sshll.u32 [#allocation15], 4
      %s1705 = int_to_ptr.vmem [resolvable:$true] %s1704
      %s1706 = sshll.u32 %s9, 4
      %s1707 = int_to_ptr.hbm [resolvable:$true] %s1706
      %1712 = dma.vmem_to_hbm [thread:$0]  %s1705, 1024, %s1707, [#allocation4], 512, 512, 32
    $region69: #{tpu_custom_call.1} parent=1 // pred_fallthru
      _
    // Predicated region
    $region70: #{tpu_custom_call.1} parent=1 // pred_check
      _
    $region71: #{tpu_custom_call.1} parent=1 // pred_check_branch
      %1714 = sbr.rel (0) target = $region73
    $region72: #{tpu_custom_call.1} parent=1 // pred_region
      %1716 = dma.done [#allocation4], 1024
    $region73: #{tpu_custom_call.1} parent=1 // pred_fallthru
      _
    %1717 = vsyncpa [#allocation3], 1
    %1718 = vsyncpa [#allocation7], 1
    %1719 = vsyncpa [#allocation10], 1
    %1720 = vsyncpa [#allocation13], 1
    %1721 = vsyncpa [#allocation4], 1
    %1722 = vsyncpa [#allocation5], 1

</llo_original>
